<compile_context>
chip_gen: v7x
topology: tpu7x:2x2x1
jax: 0.10.0
libtpu: 0.0.40
codegen_flags: <defaults>
</compile_context>

<pallas_src>
import math

import jax
import jax.numpy as jnp
from jax import lax
from jax.experimental import pallas as pl
from jax.experimental.pallas import tpu as pltpu


NEG = -3.0e4  # additive padding mask; exp(NEG - max) == 0 in f32, bf16-representable


# --------------------------------------------------------------------------
# helpers
# --------------------------------------------------------------------------
def _round_up(x, m):
    return ((x + m - 1) // m) * m


def _vmem_capacity_bytes():
    """Per-core VMEM capacity; conservative 64 MiB fallback (v7x per-TC)."""
    try:
        cap = int(pltpu.get_tpu_info().vmem_capacity_bytes)
        if cap >= 32 * 2 ** 20:
            return cap
    except Exception:
        pass
    return 64 * 2 ** 20


def _resident_spec(block_shape, index_map):
    """Constant-index resident input: single-buffered when this JAX supports it."""
    try:
        return pl.BlockSpec(block_shape, index_map, pipeline_mode=pl.Buffered(1))
    except Exception:
        return pl.BlockSpec(block_shape, index_map)


# --------------------------------------------------------------------------
# Fused kernels: TwoMLPHead + FastRCNN predictor + fastrcnn_loss partials
# --------------------------------------------------------------------------
def _make_kernels(num_bins, Cpad, Bpad, Tpad, rep, tile_r):
    out_pad = Cpad + Bpad + Tpad
    beta = 1.0 / 9.0

    def epilogue(acc, b1, w2, b2, wh, bh, cls_c, box_c, th_c, sb):
        # ---- rest of the box head + fused predictor head (f32 math) ----
        h1 = jnp.maximum(acc + b1, 0.0)
        h2 = jnp.maximum(
            jnp.dot(h1.astype(w2.dtype), w2,
                    preferred_element_type=jnp.float32) + b2, 0.0)
        slab = jnp.dot(h2.astype(wh.dtype), wh,
                       preferred_element_type=jnp.float32) + bh   # [tile_r, out_pad]

        # ---- packed sideband: [label, regt0..3, theta, 0, 0] ----
        label = sb[:, 0:1]
        regt = sb[:, 1:5]
        ttgt = sb[:, 5:6]
        valid = (label >= 0.0).astype(jnp.float32)   # padding rows carry label = -1
        pos = (label > 0.0).astype(jnp.float32)

        # ---- classification CE over the 128-aligned cls block ----
        cls = slab[:, :Cpad]
        zc = cls + cls_c[0:1, :]                     # additive padding mask
        mc = jnp.max(zc, axis=-1, keepdims=True)
        lse = mc + jnp.log(jnp.sum(jnp.exp(zc - mc), axis=-1, keepdims=True))
        picked = jnp.sum(jnp.where(cls_c[1:2, :] == label, cls, 0.0),
                         axis=-1, keepdims=True)
        closs = jnp.sum(valid * (lse - picked), keepdims=True)        # (1, 1)

        # ---- class-gathered smooth-L1 over the 128-aligned box block ----
        box = slab[:, Cpad:Cpad + Bpad]
        tgt = jnp.dot(regt, box_c[1:5, :],
                      preferred_element_type=jnp.float32)             # 4 -> 4C scatter
        d = box - tgt
        ad = jnp.abs(d)
        sl1 = jnp.where(ad < beta, 0.5 * d * d / beta, ad - 0.5 * beta)
        match = (box_c[0:1, :] == label) & (label > 0.0)
        bloss = jnp.sum(jnp.where(match, sl1, 0.0), keepdims=True)    # (1, 1)

        # ---- theta loss on positives over the 128-aligned theta block ----
        th = slab[:, Cpad + Bpad:Cpad + Bpad + Tpad]
        if num_bins == 1:
            pred = jnp.sum(jnp.where(th_c[1:2, :] == 0.0, th, 0.0),
                           axis=-1, keepdims=True)
            diff = pred - ttgt
            tloss = jnp.sum(pos * diff * diff, keepdims=True)
        else:
            bin_size = math.pi / num_bins
            tb = jnp.clip(jnp.floor(ttgt * (1.0 / bin_size)), 0.0, num_bins - 1.0)
            zt = th + th_c[0:1, :]                   # masks background col + padding
            mt = jnp.max(zt, axis=-1, keepdims=True)
            lset = mt + jnp.log(jnp.sum(jnp.exp(zt - mt), axis=-1, keepdims=True))
            pickedt = jnp.sum(jnp.where(th_c[1:2, :] == tb, th, 0.0),
                              axis=-1, keepdims=True)
            tloss = jnp.sum(pos * (lset - pickedt), keepdims=True)

        pos_sum = jnp.sum(pos, keepdims=True)
        valid_sum = jnp.sum(valid, keepdims=True)

        # lane-dense [8, 128] per-tile loss partial (row 0, lanes 0..4)
        lane = lax.broadcasted_iota(jnp.int32, (8, 128), 1)
        row = lax.broadcasted_iota(jnp.int32, (8, 128), 0)
        r0 = row == 0
        part = jnp.where(r0 & (lane == 0), closs,
               jnp.where(r0 & (lane == 1), bloss,
               jnp.where(r0 & (lane == 2), tloss,
               jnp.where(r0 & (lane == 3), pos_sum,
               jnp.where(r0 & (lane == 4), valid_sum, 0.0)))))
        return slab, part

    def resident_kernel(x_ref, w1_ref, b1_ref, w2_ref, b2_ref, wh_ref, bh_ref,
                        cls_ref, box_ref, th_ref, sb_ref, slab_ref, lpart_ref):
        acc = jnp.dot(x_ref[...], w1_ref[...], preferred_element_type=jnp.float32)
        slab, part = epilogue(acc, b1_ref[...], w2_ref[...], b2_ref[...],
                              wh_ref[...], bh_ref[...], cls_ref[...],
                              box_ref[...], th_ref[...], sb_ref[...])
        slab_ref[...] = slab.astype(slab_ref.dtype)
        lpart_ref[...] = part

    def ksplit_kernel(x_ref, w1_ref, b1_ref, w2_ref, b2_ref, wh_ref, bh_ref,
                      cls_ref, box_ref, th_ref, sb_ref, slab_ref, lpart_ref,
                      acc_ref):
        k = pl.program_id(0)
        i = pl.program_id(1)
        row0 = pl.multiple_of(i * tile_r, tile_r)

        @pl.when(k == 0)
        def _():
            acc_ref[pl.ds(row0, tile_r), :] = jnp.zeros((tile_r, rep), jnp.float32)

        acc_ref[pl.ds(row0, tile_r), :] += jnp.dot(
            x_ref[...], w1_ref[...], preferred_element_type=jnp.float32)

        @pl.when(k == pl.num_programs(0) - 1)
        def _():
            acc = acc_ref[pl.ds(row0, tile_r), :]
            slab, part = epilogue(acc, b1_ref[...], w2_ref[...], b2_ref[...],
                                  wh_ref[...], bh_ref[...], cls_ref[...],
                                  box_ref[...], th_ref[...], sb_ref[...])
            slab_ref[...] = slab.astype(slab_ref.dtype)
            lpart_ref[...] = part

    return resident_kernel, ksplit_kernel


# --------------------------------------------------------------------------
# RoIAlign (single level, sampling_ratio=1, aligned=False) -- plain JAX glue
# --------------------------------------------------------------------------
def roi_align_flat(features, rois, batch_idx, output_size, spatial_scale=1.0):
    """features: [N,C,H,W]; rois: [R,4]; returns flat [R, C*P*P] bf16."""
    # TODO(synk): the data-dependent bilinear gather stays in XLA; a Pallas version
    # would need PrefetchScalarGridSpec + make_async_copy row gathers.
    _, _, H, W = features.shape
    P = output_size

    def one_roi(roi, b):
        feat = features[b]
        x1 = roi[0] * spatial_scale
        y1 = roi[1] * spatial_scale
        x2 = roi[2] * spatial_scale
        y2 = roi[3] * spatial_scale
        roi_w = jnp.maximum(x2 - x1, 1.0)
        roi_h = jnp.maximum(y2 - y1, 1.0)
        ys = y1 + (jnp.arange(P, dtype=jnp.float32) + 0.5) * (roi_h / P)
        xs = x1 + (jnp.arange(P, dtype=jnp.float32) + 0.5) * (roi_w / P)

        def sample(y, x):
            valid = (y > -1.0) & (y < H) & (x > -1.0) & (x < W)
            y = jnp.clip(y, 0.0, H - 1.0)
            x = jnp.clip(x, 0.0, W - 1.0)
            y0 = jnp.floor(y).astype(jnp.int32)
            x0 = jnp.floor(x).astype(jnp.int32)
            y1i = jnp.minimum(y0 + 1, H - 1)
            x1i = jnp.minimum(x0 + 1, W - 1)
            ly = y - y0.astype(jnp.float32)
            lx = x - x0.astype(jnp.float32)
            hy, hx = 1.0 - ly, 1.0 - lx
            v = (hy * hx * feat[:, y0, x0] + hy * lx * feat[:, y0, x1i]
                 + ly * hx * feat[:, y1i, x0] + ly * lx * feat[:, y1i, x1i])
            return jnp.where(valid, v, 0.0)

        grid = jax.vmap(lambda y: jax.vmap(lambda x: sample(y, x))(xs))(ys)
        return jnp.transpose(grid, (2, 0, 1)).reshape(-1)

    return jax.vmap(one_roi)(rois, batch_idx).astype(jnp.bfloat16)


# --------------------------------------------------------------------------
# RoIHeads
# --------------------------------------------------------------------------
class RoIHeadsPallas:
    def __init__(self, key, in_channels, pool_size, representation_size,
                 num_classes, num_theta_bins, tile_r=256, tile_k=2048,
                 force_k_split=False, score_thresh=0.05, nms_thresh=0.5,
                 detections_per_img=100):
        self.in_channels = in_channels
        self.pool_size = pool_size
        self.rep = representation_size
        self.num_classes = num_classes
        self.num_bins = num_theta_bins
        self.num_theta = num_theta_bins + 1          # column 0 == background
        self.score_thresh = score_thresh
        self.nms_thresh = nms_thresh
        self.detections_per_img = detections_per_img

        in_feat = in_channels * pool_size * pool_size
        self.in_feat = in_feat
        C, T, rep = num_classes, self.num_theta, representation_size

        # lane-padded fused head layout: cls | box | theta, each on a 128 boundary
        self.Cpad = _round_up(max(C, 128), 128)
        self.Bpad = _round_up(max(4 * C, 128), 128)
        self.Tpad = _round_up(max(T, 128), 128)
        self.out_pad = self.Cpad + self.Bpad + self.Tpad

        self.tile_r = max(16, _round_up(tile_r, 16))

        # ---- plan selection against the per-core VMEM budget ----
        cap = _vmem_capacity_bytes()
        self.vmem_limit = int(0.80 * cap)
        in_feat_128 = _round_up(in_feat, 128)
        resident_bytes = (in_feat_128 * rep * 2                 # w1 bf16 (Buffered(1))
                          + rep * rep * 2 + rep * self.out_pad * 2
                          + 4 * (2 * rep + 2 * self.out_pad)
                          + 4 * (2 * self.Cpad + 5 * self.Bpad + 2 * self.Tpad))
        stream_bytes = 2 * (self.tile_r * in_feat_128 * 2
                            + self.tile_r * 8 * 4
                            + self.tile_r * self.out_pad * 2) + 2 * 8 * 128 * 4
        work_bytes = (self.tile_r * rep * 4
                      + 6 * self.tile_r * max(self.out_pad, rep) * 4)
        if (not force_k_split
                and resident_bytes + stream_bytes + work_bytes <= int(0.70 * cap)):
            self.plan = "resident"
            self.tile_k = None
            self.in_feat_pad = in_feat_128
        else:
            # K-outer / R-inner split: pad in_feat up to a tile_k multiple instead of
            # silently falling back to a whole-w1 block.
            self.plan = "ksplit"
            tk = max(128, _round_up(tile_k, 128))
            self.tile_k = tk
            self.in_feat_pad = _round_up(in_feat, tk)

        # ---- parameters (bf16 weights for the MXU, f32 biases) ----
        ks = jax.random.split(key, 5)
        s = 0.1
        w1 = s * jax.random.normal(ks[0], (in_feat, rep), jnp.float32)
        w1 = jnp.pad(w1, ((0, self.in_feat_pad - in_feat), (0, 0)))
        w2 = s * jax.random.normal(ks[1], (rep, rep), jnp.float32)
        wc = s * jax.random.normal(ks[2], (rep, C), jnp.float32)
        wb = s * jax.random.normal(ks[3], (rep, 4 * C), jnp.float32)
        wt = s * jax.random.normal(ks[4], (rep, T), jnp.float32)
        wh = jnp.zeros((rep, self.out_pad), jnp.float32)
        wh = wh.at[:, :C].set(wc)
        wh = wh.at[:, self.Cpad:self.Cpad + 4 * C].set(wb)
        wh = wh.at[:, self.Cpad + self.Bpad:self.Cpad + self.Bpad + T].set(wt)
        self.params = {
            "w1": w1.astype(jnp.bfloat16), "b1": jnp.zeros((1, rep), jnp.float32),
            "w2": w2.astype(jnp.bfloat16), "b2": jnp.zeros((1, rep), jnp.float32),
            "wh": wh.astype(jnp.bfloat16),
            "bh": jnp.zeros((1, self.out_pad), jnp.float32),
        }

        # ---- precomputed column sidebands (replace in-kernel iota/div/mod math) ----
        ccol = jnp.arange(self.Cpad, dtype=jnp.float32)
        cls_const = jnp.stack([jnp.where(ccol < C, 0.0, NEG),
                               jnp.where(ccol < C, ccol, -2.0)])          # [2, Cpad]
        bcol = jnp.arange(self.Bpad, dtype=jnp.int32)
        in_box = bcol < 4 * C
        box_cls = jnp.where(in_box, bcol // 4, -2).astype(jnp.float32)
        box_j = bcol % 4
        sel = (in_box[None, :]
               & (box_j[None, :] == jnp.arange(4)[:, None])).astype(jnp.float32)
        box_const = jnp.concatenate([box_cls[None, :], sel], axis=0)      # [5, Bpad]
        tcol = jnp.arange(self.Tpad, dtype=jnp.int32)
        is_bin = (tcol >= 1) & (tcol < T)
        th_const = jnp.stack([jnp.where(is_bin, 0.0, NEG),
                              jnp.where(is_bin, tcol - 1, -2).astype(jnp.float32)])
        self.consts = (cls_const, box_const, th_const)

    # ---- box_roi_pool ----
    def box_roi_pool(self, features, proposals, image_shapes):
        rois = jnp.concatenate(proposals, axis=0)
        batch_idx = jnp.concatenate(
            [jnp.full((p.shape[0],), i, jnp.int32)
             for i, p in enumerate(proposals)], axis=0)
        return roi_align_flat(features, rois, batch_idx, self.pool_size, 1.0)

    # ---- fused head + loss kernel launcher ----
    def _run_head(self, x, sb, tile_r):
        r_pad = x.shape[0]
        num_r = r_pad // tile_r
        rep, out_pad = self.rep, self.out_pad
        p = self.params
        cls_const, box_const, th_const = self.consts
        resident_kernel, ksplit_kernel = _make_kernels(
            self.num_bins, self.Cpad, self.Bpad, self.Tpad, rep, tile_r)

        out_shape = (jax.ShapeDtypeStruct((r_pad, out_pad), jnp.bfloat16),
                     jax.ShapeDtypeStruct((num_r * 8, 128), jnp.float32))
        args = (x, p["w1"], p["b1"], p["w2"], p["b2"], p["wh"], p["bh"],
                cls_const, box_const, th_const, sb)

        if self.plan == "resident":
            in_specs = [
                pl.BlockSpec((tile_r, self.in_feat_pad), lambda i: (i, 0)),
                _resident_spec((self.in_feat_pad, rep), lambda i: (0, 0)),
                _resident_spec((1, rep), lambda i: (0, 0)),
                _resident_spec((rep, rep), lambda i: (0, 0)),
                _resident_spec((1, rep), lambda i: (0, 0)),
                _resident_spec((rep, out_pad), lambda i: (0, 0)),
                _resident_spec((1, out_pad), lambda i: (0, 0)),
                _resident_spec((2, self.Cpad), lambda i: (0, 0)),
                _resident_spec((5, self.Bpad), lambda i: (0, 0)),
                _resident_spec((2, self.Tpad), lambda i: (0, 0)),
                pl.BlockSpec((tile_r, 8), lambda i: (i, 0)),
            ]
            out_specs = (pl.BlockSpec((tile_r, out_pad), lambda i: (i, 0)),
                         pl.BlockSpec((8, 128), lambda i: (i, 0)))
            return pl.pallas_call(
                resident_kernel,
                grid=(num_r,),
                in_specs=in_specs, out_specs=out_specs, out_shape=out_shape,
                compiler_params=pltpu.CompilerParams(
                    dimension_semantics=("parallel",),
                    vmem_limit_bytes=self.vmem_limit),
            )(*args)

        # K-outer / R-inner fallback: w1 and x each streamed from HBM exactly once.
        tile_k = self.tile_k
        num_k = self.in_feat_pad // tile_k
        nk = num_k

        def out_idx(k, i):
            # stay pinned to block 0 until the last K step -> each output block is
            # DMAed back to HBM exactly once (no stale / duplicate writebacks).
            return (jnp.where(k == nk - 1, i, 0), 0)

        in_specs = [
            pl.BlockSpec((tile_r, tile_k), lambda k, i: (i, k)),
            pl.BlockSpec((tile_k, rep), lambda k, i: (k, 0)),
            _resident_spec((1, rep), lambda k, i: (0, 0)),
            _resident_spec((rep, rep), lambda k, i: (0, 0)),
            _resident_spec((1, rep), lambda k, i: (0, 0)),
            _resident_spec((rep, out_pad), lambda k, i: (0, 0)),
            _resident_spec((1, out_pad), lambda k, i: (0, 0)),
            _resident_spec((2, self.Cpad), lambda k, i: (0, 0)),
            _resident_spec((5, self.Bpad), lambda k, i: (0, 0)),
            _resident_spec((2, self.Tpad), lambda k, i: (0, 0)),
            pl.BlockSpec((tile_r, 8), lambda k, i: (i, 0)),
        ]
        out_specs = (pl.BlockSpec((tile_r, out_pad), out_idx),
                     pl.BlockSpec((8, 128), out_idx))
        return pl.pallas_call(
            ksplit_kernel,
            grid=(num_k, num_r),
            in_specs=in_specs, out_specs=out_specs, out_shape=out_shape,
            scratch_shapes=[pltpu.VMEM((r_pad, rep), jnp.float32)],
            compiler_params=pltpu.CompilerParams(
                dimension_semantics=("arbitrary", "arbitrary"),
                vmem_limit_bytes=self.vmem_limit),
        )(*args)

    # ---- forward (training path) ----
    def forward(self, features, proposals, image_shapes, targets=None, training=True):
        result = []
        losses = {}

        pooled = self.box_roi_pool(features, proposals, image_shapes)  # [R, in_feat]
        R = pooled.shape[0]

        if training:
            # TODO(synk): Matcher / balanced pos-neg sampler / box_coder.encode
            # (select_training_samples) are data-dependent; targets already carry
            # per-proposal sampled labels, regression targets and theta targets.
            labels = jnp.concatenate([t["labels"] for t in targets]).astype(jnp.float32)
            regt = jnp.concatenate([t["regression_targets"] for t in targets]
                                   ).astype(jnp.float32)
            ttgt = jnp.concatenate([t["thetas"] for t in targets]).astype(jnp.float32)
        else:
            labels = jnp.zeros((R,), jnp.float32)
            regt = jnp.zeros((R, 4), jnp.float32)
            ttgt = jnp.zeros((R,), jnp.float32)

        sideband = jnp.concatenate(
            [labels[:, None], regt, ttgt[:, None], jnp.zeros((R, 2), jnp.float32)],
            axis=1)                                                     # [R, 8]

        tile_r = min(self.tile_r, _round_up(R, 16))
        r_pad = _round_up(R, tile_r)
        pad = r_pad - R
        if pad or self.in_feat_pad != self.in_feat:
            pooled = jnp.pad(pooled, ((0, pad), (0, self.in_feat_pad - self.in_feat)))
        if pad:
            sideband = jnp.pad(sideband, ((0, pad), (0, 0)))
            sideband = sideband.at[R:, 0].set(-1.0)    # padding rows: label = -1

        slab, lparts = self._run_head(pooled, sideband, tile_r)

        C = self.num_classes
        class_logits = slab[:R, :C]
        box_regression = slab[:R, self.Cpad:self.Cpad + 4 * C]
        theta_preds = slab[:R, self.Cpad + self.Bpad:
                           self.Cpad + self.Bpad + self.num_theta]
        self._last_outputs = (class_logits, box_regression, theta_preds)

        if training:
            sums = jnp.sum(lparts, axis=0)             # [128]; lanes 0..4 used
            num_valid = jnp.maximum(sums[4], 1.0)      # == labels.numel()
            num_pos = jnp.maximum(sums[3], 1.0)
            losses = {"loss_classifier": sums[0] / num_valid,
                      "loss_box_reg": sums[1] / num_valid,
                      "loss_theta": sums[2] / num_pos}
        else:
            # TODO(synk): postprocess_detections (score filter + batched NMS) produces
            # variable-length outputs; no clean Pallas equivalent.
            pass
        return result, losses


# --------------------------------------------------------------------------
# pure-JAX reference for the loss path (same bf16-quantized weights, f32 math)
# --------------------------------------------------------------------------
def _reference_losses(pooled_bf16, heads, labels, regt, ttgt):
    p = heads.params
    x = pooled_bf16.astype(jnp.float32)
    x = jnp.pad(x, ((0, 0), (0, heads.in_feat_pad - heads.in_feat)))
    h1 = jax.nn.relu(x @ p["w1"].astype(jnp.float32) + p["b1"])
    h2 = jax.nn.relu(h1 @ p["w2"].astype(jnp.float32) + p["b2"])
    slab = h2 @ p["wh"].astype(jnp.float32) + p["bh"]
    C, T = heads.num_classes, heads.num_theta
    cls = slab[:, :C]
    box = slab[:, heads.Cpad:heads.Cpad + 4 * C]
    th = slab[:, heads.Cpad + heads.Bpad:heads.Cpad + heads.Bpad + T]
    lab = labels.reshape(-1).astype(jnp.int32)
    R = lab.shape[0]

    lse = jax.scipy.special.logsumexp(cls, axis=-1)
    closs = jnp.mean(lse - cls[jnp.arange(R), lab])

    pos = lab > 0
    boxr = box.reshape(R, C, 4)
    sel = boxr[jnp.arange(R), lab]
    d = sel - regt
    ad = jnp.abs(d)
    beta = 1.0 / 9.0
    sl1 = jnp.where(ad < beta, 0.5 * d * d / beta, ad - 0.5 * beta)
    bloss = jnp.sum(jnp.where(pos[:, None], sl1, 0.0)) / R

    preds = th[:, 1:]
    nb = preds.shape[1]
    tt = ttgt.reshape(-1)
    npos = jnp.maximum(jnp.sum(pos.astype(jnp.float32)), 1.0)
    if nb == 1:
        diff = preds[:, 0] - tt
        tloss = jnp.sum(jnp.where(pos, diff * diff, 0.0)) / npos
    else:
        bs = math.pi / nb
        tb = jnp.clip((tt / bs).astype(jnp.int32), 0, nb - 1)
        lset = jax.scipy.special.logsumexp(preds, axis=-1)
        ce = lset - preds[jnp.arange(R), tb]
        tloss = jnp.sum(jnp.where(pos, ce, 0.0)) / npos
    return closs, bloss, tloss


# --------------------------------------------------------------------------
if __name__ == "__main__":
    key = jax.random.PRNGKey(0)
    N, Cf, Hf, Wf = 2, 4, 16, 16           # batch, channels, spatial
    P = 8                                  # RoIAlign output -> in_feat = 4*8*8 = 256
    rep = 128                              # representation_size (lane-aligned)
    num_classes = 5                        # including background
    num_theta_bins = 4                     # theta head has num_theta_bins + 1 columns
    R_per_img = 14                         # -> R = 28, exercises padded (-1) rows

    ks = jax.random.split(key, 8)
    features = jax.random.normal(ks[0], (N, Cf, Hf, Wf), jnp.float32)

    def make_props(k):
        xy = jax.random.uniform(k, (R_per_img, 2), minval=0.0, maxval=9.0)
        wh = jax.random.uniform(jax.random.fold_in(k, 1), (R_per_img, 2),
                                minval=2.0, maxval=6.0)
        return jnp.concatenate([xy, xy + wh], axis=-1)

    proposals = [make_props(ks[1]), make_props(ks[2])]
    image_shapes = [(Hf, Wf), (Hf, Wf)]

    lab0 = jnp.array([1, 0, 2, 0, 3, 0, 4, 0, 1, 2, 0, 0, 3, 0], jnp.int32)
    lab1 = jnp.array([0, 2, 0, 0, 1, 3, 0, 0, 0, 0, 2, 4, 0, 1], jnp.int32)
    labels = [lab0, lab1]
    regression_targets = [0.1 * jax.random.normal(ks[3], (R_per_img, 4), jnp.float32),
                          0.1 * jax.random.normal(ks[4], (R_per_img, 4), jnp.float32)]
    theta_targets = [jax.random.uniform(ks[5], (R_per_img,), minval=0.0,
                                        maxval=math.pi - 1e-3),
                     jax.random.uniform(ks[6], (R_per_img,), minval=0.0,
                                        maxval=math.pi - 1e-3)]
    targets = [{"labels": labels[i],
                "regression_targets": regression_targets[i],
                "thetas": theta_targets[i]} for i in range(N)]

    lab_cat = jnp.concatenate(labels).astype(jnp.int32)
    regt_cat = jnp.concatenate(regression_targets).astype(jnp.float32)
    ttgt_cat = jnp.concatenate(theta_targets).astype(jnp.float32)

    def check(heads):
        result, losses = heads.forward(features, proposals, image_shapes,
                                       targets, training=True)
        losses = jax.tree_util.tree_map(jax.block_until_ready, losses)
        assert all(bool(jnp.isfinite(v)) for v in losses.values())
        pooled_ref = heads.box_roi_pool(features, proposals, image_shapes)
        rc, rb, rt = _reference_losses(pooled_ref, heads, lab_cat, regt_cat, ttgt_cat)
        assert jnp.allclose(losses["loss_classifier"], rc, rtol=5e-2, atol=5e-2), \
            (losses["loss_classifier"], rc)
        assert jnp.allclose(losses["loss_box_reg"], rb, rtol=5e-2, atol=5e-2), \
            (losses["loss_box_reg"], rb)
        assert jnp.allclose(losses["loss_theta"], rt, rtol=5e-2, atol=5e-2), \
            (losses["loss_theta"], rt)

    # main path: resident single-buffered w1, single K step, R tiles megacore-parallel
    heads_a = RoIHeadsPallas(jax.random.PRNGKey(42), in_channels=Cf, pool_size=P,
                             representation_size=rep, num_classes=num_classes,
                             num_theta_bins=num_theta_bins)
    check(heads_a)

    # fallback path: K-outer / R-inner split (w1 and x each streamed exactly once)
    heads_b = RoIHeadsPallas(jax.random.PRNGKey(7), in_channels=Cf, pool_size=P,
                             representation_size=rep, num_classes=num_classes,
                             num_theta_bins=num_theta_bins,
                             tile_r=16, tile_k=128, force_k_split=True)
    check(heads_b)

    print("KERNEL_OK")
</pallas_src>

<mosaic_0001>
module attributes {stable_mosaic.version = 11 : i64} {
  func.func @resident_kernel(%arg0: i32, %arg1: memref<32x256xbf16, #tpu.memory_space<vmem>>, %arg2: memref<256x128xbf16, #tpu.memory_space<vmem>>, %arg3: memref<1x128xf32, #tpu.memory_space<vmem>>, %arg4: memref<128x128xbf16, #tpu.memory_space<vmem>>, %arg5: memref<1x128xf32, #tpu.memory_space<vmem>>, %arg6: memref<128x384xbf16, #tpu.memory_space<vmem>>, %arg7: memref<1x384xf32, #tpu.memory_space<vmem>>, %arg8: memref<2x128xf32, #tpu.memory_space<vmem>>, %arg9: memref<5x128xf32, #tpu.memory_space<vmem>>, %arg10: memref<2x128xf32, #tpu.memory_space<vmem>>, %arg11: memref<32x8xf32, #tpu.memory_space<vmem>>, %arg12: memref<32x384xbf16, #tpu.memory_space<vmem>>, %arg13: memref<8x128xf32, #tpu.memory_space<vmem>>) attributes {dimension_semantics = [#tpu.dimension_semantics<parallel>], iteration_bounds = array<i64: 1>, scalar_prefetch = 0 : i64, scratch_operands = 0 : i64, tpu.core_type = #tpu.core_type<tc>, window_params = [{transform_indices = @transform_0, window_bounds = array<i64: 32, 256>}, {pipeline_mode = #tpu.pipeline_mode<synchronous>, transform_indices = @transform_1, window_bounds = array<i64: 256, 128>}, {pipeline_mode = #tpu.pipeline_mode<synchronous>, transform_indices = @transform_2, window_bounds = array<i64: 1, 128>}, {pipeline_mode = #tpu.pipeline_mode<synchronous>, transform_indices = @transform_3, window_bounds = array<i64: 128, 128>}, {pipeline_mode = #tpu.pipeline_mode<synchronous>, transform_indices = @transform_4, window_bounds = array<i64: 1, 128>}, {pipeline_mode = #tpu.pipeline_mode<synchronous>, transform_indices = @transform_5, window_bounds = array<i64: 128, 384>}, {pipeline_mode = #tpu.pipeline_mode<synchronous>, transform_indices = @transform_6, window_bounds = array<i64: 1, 384>}, {pipeline_mode = #tpu.pipeline_mode<synchronous>, transform_indices = @transform_7, window_bounds = array<i64: 2, 128>}, {pipeline_mode = #tpu.pipeline_mode<synchronous>, transform_indices = @transform_8, window_bounds = array<i64: 5, 128>}, {pipeline_mode = #tpu.pipeline_mode<synchronous>, transform_indices = @transform_9, window_bounds = array<i64: 2, 128>}, {transform_indices = @transform_10, window_bounds = array<i64: 32, 8>}, {transform_indices = @transform_11, window_bounds = array<i64: 32, 384>}, {transform_indices = @transform_12, window_bounds = array<i64: 8, 128>}]} {
    %c0 = arith.constant 0 : index
    %c0_0 = arith.constant 0 : index
    %0 = vector.load %arg1[%c0, %c0_0] : memref<32x256xbf16, #tpu.memory_space<vmem>>, vector<32x256xbf16>
    %c0_1 = arith.constant 0 : index
    %c0_2 = arith.constant 0 : index
    %1 = vector.load %arg2[%c0_1, %c0_2] : memref<256x128xbf16, #tpu.memory_space<vmem>>, vector<256x128xbf16>
    %cst = arith.constant dense<0.000000e+00> : vector<32x128xf32>
    %2 = tpu.matmul %0, %1, %cst {dimension_numbers = #tpu.dot_dimension_numbers<[1], [0], [0], [1], [0, 0, 1, 1], [], []>} : vector<32x256xbf16>, vector<256x128xbf16>, vector<32x128xf32> -> vector<32x128xf32>
    %c0_3 = arith.constant 0 : index
    %c0_4 = arith.constant 0 : index
    %3 = vector.load %arg3[%c0_3, %c0_4] : memref<1x128xf32, #tpu.memory_space<vmem>>, vector<1x128xf32>
    %c0_5 = arith.constant 0 : index
    %c0_6 = arith.constant 0 : index
    %4 = vector.load %arg4[%c0_5, %c0_6] : memref<128x128xbf16, #tpu.memory_space<vmem>>, vector<128x128xbf16>
    %c0_7 = arith.constant 0 : index
    %c0_8 = arith.constant 0 : index
    %5 = vector.load %arg5[%c0_7, %c0_8] : memref<1x128xf32, #tpu.memory_space<vmem>>, vector<1x128xf32>
    %c0_9 = arith.constant 0 : index
    %c0_10 = arith.constant 0 : index
    %6 = vector.load %arg6[%c0_9, %c0_10] : memref<128x384xbf16, #tpu.memory_space<vmem>>, vector<128x384xbf16>
    %c0_11 = arith.constant 0 : index
    %c0_12 = arith.constant 0 : index
    %7 = vector.load %arg7[%c0_11, %c0_12] : memref<1x384xf32, #tpu.memory_space<vmem>>, vector<1x384xf32>
    %c0_13 = arith.constant 0 : index
    %c0_14 = arith.constant 0 : index
    %8 = vector.load %arg8[%c0_13, %c0_14] : memref<2x128xf32, #tpu.memory_space<vmem>>, vector<2x128xf32>
    %c0_15 = arith.constant 0 : index
    %c0_16 = arith.constant 0 : index
    %9 = vector.load %arg9[%c0_15, %c0_16] : memref<5x128xf32, #tpu.memory_space<vmem>>, vector<5x128xf32>
    %c0_17 = arith.constant 0 : index
    %c0_18 = arith.constant 0 : index
    %10 = vector.load %arg10[%c0_17, %c0_18] : memref<2x128xf32, #tpu.memory_space<vmem>>, vector<2x128xf32>
    %c0_19 = arith.constant 0 : index
    %c0_20 = arith.constant 0 : index
    %11 = vector.load %arg11[%c0_19, %c0_20] : memref<32x8xf32, #tpu.memory_space<vmem>>, vector<32x8xf32>
    %12 = vector.broadcast %3 : vector<1x128xf32> to vector<32x128xf32>
    %13 = arith.addf %2, %12 : vector<32x128xf32>
    %cst_21 = arith.constant 0.000000e+00 : f32
    %14 = vector.broadcast %cst_21 : f32 to vector<32x128xf32>
    %15 = arith.maximumf %13, %14 : vector<32x128xf32>
    %16 = arith.truncf %15 : vector<32x128xf32> to vector<32x128xbf16>
    %cst_22 = arith.constant dense<0.000000e+00> : vector<32x128xf32>
    %17 = tpu.matmul %16, %4, %cst_22 {dimension_numbers = #tpu.dot_dimension_numbers<[1], [0], [0], [1], [0, 0, 1, 1], [], []>} : vector<32x128xbf16>, vector<128x128xbf16>, vector<32x128xf32> -> vector<32x128xf32>
    %18 = vector.broadcast %5 : vector<1x128xf32> to vector<32x128xf32>
    %19 = arith.addf %17, %18 : vector<32x128xf32>
    %cst_23 = arith.constant 0.000000e+00 : f32
    %20 = vector.broadcast %cst_23 : f32 to vector<32x128xf32>
    %21 = arith.maximumf %19, %20 : vector<32x128xf32>
    %22 = arith.truncf %21 : vector<32x128xf32> to vector<32x128xbf16>
    %cst_24 = arith.constant dense<0.000000e+00> : vector<32x384xf32>
    %23 = tpu.matmul %22, %6, %cst_24 {dimension_numbers = #tpu.dot_dimension_numbers<[1], [0], [0], [1], [0, 0, 1, 1], [], []>} : vector<32x128xbf16>, vector<128x384xbf16>, vector<32x384xf32> -> vector<32x384xf32>
    %24 = vector.broadcast %7 : vector<1x384xf32> to vector<32x384xf32>
    %25 = arith.addf %23, %24 : vector<32x384xf32>
    %26 = vector.extract_strided_slice %11 {offsets = [0, 0], sizes = [32, 1], strides = [1, 1]} : vector<32x8xf32> to vector<32x1xf32>
    %27 = vector.extract_strided_slice %11 {offsets = [0, 1], sizes = [32, 4], strides = [1, 1]} : vector<32x8xf32> to vector<32x4xf32>
    %28 = vector.extract_strided_slice %11 {offsets = [0, 5], sizes = [32, 1], strides = [1, 1]} : vector<32x8xf32> to vector<32x1xf32>
    %cst_25 = arith.constant 0.000000e+00 : f32
    %29 = vector.broadcast %cst_25 : f32 to vector<32x1xf32>
    %30 = arith.cmpf oge, %26, %29 : vector<32x1xf32>
    %31 = arith.extui %30 : vector<32x1xi1> to vector<32x1xi32>
    %32 = arith.sitofp %31 : vector<32x1xi32> to vector<32x1xf32>
    %cst_26 = arith.constant 0.000000e+00 : f32
    %33 = vector.broadcast %cst_26 : f32 to vector<32x1xf32>
    %34 = arith.cmpf ogt, %26, %33 : vector<32x1xf32>
    %35 = arith.extui %34 : vector<32x1xi1> to vector<32x1xi32>
    %36 = arith.sitofp %35 : vector<32x1xi32> to vector<32x1xf32>
    %37 = vector.extract_strided_slice %25 {offsets = [0, 0], sizes = [32, 128], strides = [1, 1]} : vector<32x384xf32> to vector<32x128xf32>
    %38 = vector.extract_strided_slice %8 {offsets = [0, 0], sizes = [1, 128], strides = [1, 1]} : vector<2x128xf32> to vector<1x128xf32>
    %39 = vector.broadcast %38 : vector<1x128xf32> to vector<32x128xf32>
    %40 = arith.addf %37, %39 : vector<32x128xf32>
    %cst_27 = arith.constant dense<0xFF800000> : vector<32xf32>
    %41 = vector.multi_reduction <maximumf>, %40, %cst_27 [1] : vector<32x128xf32> to vector<32xf32>
    %42 = vector.shape_cast %41 : vector<32xf32> to vector<32x1xf32>
    %43 = vector.broadcast %42 : vector<32x1xf32> to vector<32x128xf32>
    %44 = arith.subf %40, %43 : vector<32x128xf32>
    %45 = math.exp %44 : vector<32x128xf32>
    %cst_28 = arith.constant dense<0.000000e+00> : vector<32xf32>
    %46 = vector.multi_reduction <add>, %45, %cst_28 [1] : vector<32x128xf32> to vector<32xf32>
    %47 = vector.shape_cast %46 : vector<32xf32> to vector<32x1xf32>
    %48 = math.log %47 : vector<32x1xf32>
    %49 = arith.addf %42, %48 : vector<32x1xf32>
    %50 = vector.extract_strided_slice %8 {offsets = [1, 0], sizes = [1, 128], strides = [1, 1]} : vector<2x128xf32> to vector<1x128xf32>
    %51 = vector.broadcast %50 : vector<1x128xf32> to vector<32x128xf32>
    %52 = vector.broadcast %26 : vector<32x1xf32> to vector<32x128xf32>
    %53 = arith.cmpf oeq, %51, %52 : vector<32x128xf32>
    %cst_29 = arith.constant 0.000000e+00 : f32
    %54 = vector.broadcast %cst_29 : f32 to vector<32x128xf32>
    %55 = arith.select %53, %37, %54 : vector<32x128xi1>, vector<32x128xf32>
    %cst_30 = arith.constant dense<0.000000e+00> : vector<32xf32>
    %56 = vector.multi_reduction <add>, %55, %cst_30 [1] : vector<32x128xf32> to vector<32xf32>
    %57 = vector.shape_cast %56 : vector<32xf32> to vector<32x1xf32>
    %58 = arith.subf %49, %57 : vector<32x1xf32>
    %59 = arith.mulf %32, %58 : vector<32x1xf32>
    %60 = vector.shape_cast %59 : vector<32x1xf32> to vector<1x32x1xf32>
    %cst_31 = arith.constant dense<0.000000e+00> : vector<1xf32>
    %61 = vector.multi_reduction <add>, %60, %cst_31 [1, 2] : vector<1x32x1xf32> to vector<1xf32>
    %62 = vector.shape_cast %61 : vector<1xf32> to vector<1x1x1xf32>
    %63 = vector.extract %62[0, 0, 0] : f32 from vector<1x1x1xf32>
    %64 = vector.broadcast %63 : f32 to vector<1x1xf32>
    %65 = vector.extract_strided_slice %25 {offsets = [0, 128], sizes = [32, 128], strides = [1, 1]} : vector<32x384xf32> to vector<32x128xf32>
    %66 = vector.extract_strided_slice %9 {offsets = [1, 0], sizes = [4, 128], strides = [1, 1]} : vector<5x128xf32> to vector<4x128xf32>
    %cst_32 = arith.constant dense<0.000000e+00> : vector<32x128xf32>
    %67 = tpu.matmul %27, %66, %cst_32 {dimension_numbers = #tpu.dot_dimension_numbers<[1], [0], [0], [1], [0, 0, 1, 1], [], []>} : vector<32x4xf32>, vector<4x128xf32>, vector<32x128xf32> -> vector<32x128xf32>
    %68 = arith.subf %65, %67 : vector<32x128xf32>
    %69 = math.absf %68 : vector<32x128xf32>
    %cst_33 = arith.constant 0.111111112 : f32
    %70 = vector.broadcast %cst_33 : f32 to vector<32x128xf32>
    %71 = arith.cmpf olt, %69, %70 : vector<32x128xf32>
    %cst_34 = arith.constant 5.000000e-01 : f32
    %72 = vector.broadcast %cst_34 : f32 to vector<32x128xf32>
    %73 = arith.mulf %72, %68 : vector<32x128xf32>
    %74 = arith.mulf %73, %68 : vector<32x128xf32>
    %cst_35 = arith.constant 0.111111112 : f32
    %75 = vector.broadcast %cst_35 : f32 to vector<32x128xf32>
    %76 = arith.divf %74, %75 : vector<32x128xf32>
    %cst_36 = arith.constant 0.055555556 : f32
    %77 = vector.broadcast %cst_36 : f32 to vector<32x128xf32>
    %78 = arith.subf %69, %77 : vector<32x128xf32>
    %79 = arith.select %71, %76, %78 : vector<32x128xi1>, vector<32x128xf32>
    %80 = vector.extract_strided_slice %9 {offsets = [0, 0], sizes = [1, 128], strides = [1, 1]} : vector<5x128xf32> to vector<1x128xf32>
    %81 = vector.broadcast %80 : vector<1x128xf32> to vector<32x128xf32>
    %82 = vector.broadcast %26 : vector<32x1xf32> to vector<32x128xf32>
    %83 = arith.cmpf oeq, %81, %82 : vector<32x128xf32>
    %cst_37 = arith.constant 0.000000e+00 : f32
    %84 = vector.broadcast %cst_37 : f32 to vector<32x1xf32>
    %85 = arith.cmpf ogt, %26, %84 : vector<32x1xf32>
    %86 = vector.broadcast %85 : vector<32x1xi1> to vector<32x128xi1>
    %87 = arith.andi %83, %86 : vector<32x128xi1>
    %cst_38 = arith.constant 0.000000e+00 : f32
    %88 = vector.broadcast %cst_38 : f32 to vector<32x128xf32>
    %89 = arith.select %87, %79, %88 : vector<32x128xi1>, vector<32x128xf32>
    %90 = vector.shape_cast %89 : vector<32x128xf32> to vector<1x32x128xf32>
    %cst_39 = arith.constant dense<0.000000e+00> : vector<1xf32>
    %91 = vector.multi_reduction <add>, %90, %cst_39 [1, 2] : vector<1x32x128xf32> to vector<1xf32>
    %92 = vector.shape_cast %91 : vector<1xf32> to vector<1x1x1xf32>
    %93 = vector.extract %92[0, 0, 0] : f32 from vector<1x1x1xf32>
    %94 = vector.broadcast %93 : f32 to vector<1x1xf32>
    %95 = vector.extract_strided_slice %25 {offsets = [0, 256], sizes = [32, 128], strides = [1, 1]} : vector<32x384xf32> to vector<32x128xf32>
    %cst_40 = arith.constant 1.27323949 : f32
    %96 = vector.broadcast %cst_40 : f32 to vector<32x1xf32>
    %97 = arith.mulf %28, %96 : vector<32x1xf32>
    %98 = math.floor %97 : vector<32x1xf32>
    %cst_41 = arith.constant 0.000000e+00 : f32
    %cst_42 = arith.constant 3.000000e+00 : f32
    %99 = vector.broadcast %cst_41 : f32 to vector<32x1xf32>
    %100 = arith.maximumf %99, %98 : vector<32x1xf32>
    %101 = vector.broadcast %cst_42 : f32 to vector<32x1xf32>
    %102 = arith.minimumf %101, %100 : vector<32x1xf32>
    %103 = vector.extract_strided_slice %10 {offsets = [0, 0], sizes = [1, 128], strides = [1, 1]} : vector<2x128xf32> to vector<1x128xf32>
    %104 = vector.broadcast %103 : vector<1x128xf32> to vector<32x128xf32>
    %105 = arith.addf %95, %104 : vector<32x128xf32>
    %cst_43 = arith.constant dense<0xFF800000> : vector<32xf32>
    %106 = vector.multi_reduction <maximumf>, %105, %cst_43 [1] : vector<32x128xf32> to vector<32xf32>
    %107 = vector.shape_cast %106 : vector<32xf32> to vector<32x1xf32>
    %108 = vector.broadcast %107 : vector<32x1xf32> to vector<32x128xf32>
    %109 = arith.subf %105, %108 : vector<32x128xf32>
    %110 = math.exp %109 : vector<32x128xf32>
    %cst_44 = arith.constant dense<0.000000e+00> : vector<32xf32>
    %111 = vector.multi_reduction <add>, %110, %cst_44 [1] : vector<32x128xf32> to vector<32xf32>
    %112 = vector.shape_cast %111 : vector<32xf32> to vector<32x1xf32>
    %113 = math.log %112 : vector<32x1xf32>
    %114 = arith.addf %107, %113 : vector<32x1xf32>
    %115 = vector.extract_strided_slice %10 {offsets = [1, 0], sizes = [1, 128], strides = [1, 1]} : vector<2x128xf32> to vector<1x128xf32>
    %116 = vector.broadcast %115 : vector<1x128xf32> to vector<32x128xf32>
    %117 = vector.broadcast %102 : vector<32x1xf32> to vector<32x128xf32>
    %118 = arith.cmpf oeq, %116, %117 : vector<32x128xf32>
    %cst_45 = arith.constant 0.000000e+00 : f32
    %119 = vector.broadcast %cst_45 : f32 to vector<32x128xf32>
    %120 = arith.select %118, %95, %119 : vector<32x128xi1>, vector<32x128xf32>
    %cst_46 = arith.constant dense<0.000000e+00> : vector<32xf32>
    %121 = vector.multi_reduction <add>, %120, %cst_46 [1] : vector<32x128xf32> to vector<32xf32>
    %122 = vector.shape_cast %121 : vector<32xf32> to vector<32x1xf32>
    %123 = arith.subf %114, %122 : vector<32x1xf32>
    %124 = arith.mulf %36, %123 : vector<32x1xf32>
    %125 = vector.shape_cast %124 : vector<32x1xf32> to vector<1x32x1xf32>
    %cst_47 = arith.constant dense<0.000000e+00> : vector<1xf32>
    %126 = vector.multi_reduction <add>, %125, %cst_47 [1, 2] : vector<1x32x1xf32> to vector<1xf32>
    %127 = vector.shape_cast %126 : vector<1xf32> to vector<1x1x1xf32>
    %128 = vector.extract %127[0, 0, 0] : f32 from vector<1x1x1xf32>
    %129 = vector.broadcast %128 : f32 to vector<1x1xf32>
    %130 = vector.shape_cast %36 : vector<32x1xf32> to vector<1x32x1xf32>
    %cst_48 = arith.constant dense<0.000000e+00> : vector<1xf32>
    %131 = vector.multi_reduction <add>, %130, %cst_48 [1, 2] : vector<1x32x1xf32> to vector<1xf32>
    %132 = vector.shape_cast %131 : vector<1xf32> to vector<1x1x1xf32>
    %133 = vector.extract %132[0, 0, 0] : f32 from vector<1x1x1xf32>
    %134 = vector.broadcast %133 : f32 to vector<1x1xf32>
    %135 = vector.shape_cast %32 : vector<32x1xf32> to vector<1x32x1xf32>
    %cst_49 = arith.constant dense<0.000000e+00> : vector<1xf32>
    %136 = vector.multi_reduction <add>, %135, %cst_49 [1, 2] : vector<1x32x1xf32> to vector<1xf32>
    %137 = vector.shape_cast %136 : vector<1xf32> to vector<1x1x1xf32>
    %138 = vector.extract %137[0, 0, 0] : f32 from vector<1x1x1xf32>
    %139 = vector.broadcast %138 : f32 to vector<1x1xf32>
    %140 = tpu.iota {dimensions = array<i32: 1>} : vector<8x128xi32>
    %141 = tpu.iota {dimensions = array<i32: 0>} : vector<8x128xi32>
    %c0_i32 = arith.constant 0 : i32
    %142 = vector.broadcast %c0_i32 : i32 to vector<8x128xi32>
    %143 = arith.cmpi eq, %141, %142 : vector<8x128xi32>
    %c0_i32_50 = arith.constant 0 : i32
    %144 = vector.broadcast %c0_i32_50 : i32 to vector<8x128xi32>
    %145 = arith.cmpi eq, %140, %144 : vector<8x128xi32>
    %146 = arith.andi %143, %145 : vector<8x128xi1>
    %c1_i32 = arith.constant 1 : i32
    %147 = vector.broadcast %c1_i32 : i32 to vector<8x128xi32>
    %148 = arith.cmpi eq, %140, %147 : vector<8x128xi32>
    %149 = arith.andi %143, %148 : vector<8x128xi1>
    %c2_i32 = arith.constant 2 : i32
    %150 = vector.broadcast %c2_i32 : i32 to vector<8x128xi32>
    %151 = arith.cmpi eq, %140, %150 : vector<8x128xi32>
    %152 = arith.andi %143, %151 : vector<8x128xi1>
    %c3_i32 = arith.constant 3 : i32
    %153 = vector.broadcast %c3_i32 : i32 to vector<8x128xi32>
    %154 = arith.cmpi eq, %140, %153 : vector<8x128xi32>
    %155 = arith.andi %143, %154 : vector<8x128xi1>
    %c4_i32 = arith.constant 4 : i32
    %156 = vector.broadcast %c4_i32 : i32 to vector<8x128xi32>
    %157 = arith.cmpi eq, %140, %156 : vector<8x128xi32>
    %158 = arith.andi %143, %157 : vector<8x128xi1>
    %cst_51 = arith.constant 0.000000e+00 : f32
    %159 = vector.shape_cast %139 : vector<1x1xf32> to vector<1x1xf32>
    %160 = vector.broadcast %159 : vector<1x1xf32> to vector<8x128xf32>
    %161 = vector.broadcast %cst_51 : f32 to vector<8x128xf32>
    %162 = arith.select %158, %160, %161 : vector<8x128xi1>, vector<8x128xf32>
    %163 = vector.shape_cast %134 : vector<1x1xf32> to vector<1x1xf32>
    %164 = vector.broadcast %163 : vector<1x1xf32> to vector<8x128xf32>
    %165 = arith.select %155, %164, %162 : vector<8x128xi1>, vector<8x128xf32>
    %166 = vector.shape_cast %129 : vector<1x1xf32> to vector<1x1xf32>
    %167 = vector.broadcast %166 : vector<1x1xf32> to vector<8x128xf32>
    %168 = arith.select %152, %167, %165 : vector<8x128xi1>, vector<8x128xf32>
    %169 = vector.shape_cast %94 : vector<1x1xf32> to vector<1x1xf32>
    %170 = vector.broadcast %169 : vector<1x1xf32> to vector<8x128xf32>
    %171 = arith.select %149, %170, %168 : vector<8x128xi1>, vector<8x128xf32>
    %172 = vector.shape_cast %64 : vector<1x1xf32> to vector<1x1xf32>
    %173 = vector.broadcast %172 : vector<1x1xf32> to vector<8x128xf32>
    %174 = arith.select %146, %173, %171 : vector<8x128xi1>, vector<8x128xf32>
    %175 = arith.truncf %25 : vector<32x384xf32> to vector<32x384xbf16>
    %c0_52 = arith.constant 0 : index
    %c0_53 = arith.constant 0 : index
    %176 = vector.load %arg12[%c0_52, %c0_53] : memref<32x384xbf16, #tpu.memory_space<vmem>>, vector<32x384xbf16>
    tpu.vector_store %arg12[%c0_52, %c0_53], %175 {strides = array<i32>} : memref<32x384xbf16, #tpu.memory_space<vmem>>, vector<32x384xbf16>,
    %c0_54 = arith.constant 0 : index
    %c0_55 = arith.constant 0 : index
    %177 = vector.load %arg13[%c0_54, %c0_55] : memref<8x128xf32, #tpu.memory_space<vmem>>, vector<8x128xf32>
    tpu.vector_store %arg13[%c0_54, %c0_55], %174 {strides = array<i32>} : memref<8x128xf32, #tpu.memory_space<vmem>>, vector<8x128xf32>,
    return
  }
  func.func @transform_0(%arg0: i32) -> (i32, i32) {
    %c0_i32 = arith.constant 0 : i32
    %c0_i32_0 = arith.constant 0 : i32
    return %arg0, %c0_i32 : i32, i32
  }
  func.func @transform_1(%arg0: i32) -> (i32, i32) {
    %c0_i32 = arith.constant 0 : i32
    %c0_i32_0 = arith.constant 0 : i32
    %c0_i32_1 = arith.constant 0 : i32
    return %c0_i32, %c0_i32_0 : i32, i32
  }
  func.func @transform_2(%arg0: i32) -> (i32, i32) {
    %c0_i32 = arith.constant 0 : i32
    %c0_i32_0 = arith.constant 0 : i32
    %c0_i32_1 = arith.constant 0 : i32
    return %c0_i32, %c0_i32_0 : i32, i32
  }
  func.func @transform_3(%arg0: i32) -> (i32, i32) {
    %c0_i32 = arith.constant 0 : i32
    %c0_i32_0 = arith.constant 0 : i32
    %c0_i32_1 = arith.constant 0 : i32
    return %c0_i32, %c0_i32_0 : i32, i32
  }
  func.func @transform_4(%arg0: i32) -> (i32, i32) {
    %c0_i32 = arith.constant 0 : i32
    %c0_i32_0 = arith.constant 0 : i32
    %c0_i32_1 = arith.constant 0 : i32
    return %c0_i32, %c0_i32_0 : i32, i32
  }
  func.func @transform_5(%arg0: i32) -> (i32, i32) {
    %c0_i32 = arith.constant 0 : i32
    %c0_i32_0 = arith.constant 0 : i32
    %c0_i32_1 = arith.constant 0 : i32
    return %c0_i32, %c0_i32_0 : i32, i32
  }
  func.func @transform_6(%arg0: i32) -> (i32, i32) {
    %c0_i32 = arith.constant 0 : i32
    %c0_i32_0 = arith.constant 0 : i32
    %c0_i32_1 = arith.constant 0 : i32
    return %c0_i32, %c0_i32_0 : i32, i32
  }
  func.func @transform_7(%arg0: i32) -> (i32, i32) {
    %c0_i32 = arith.constant 0 : i32
    %c0_i32_0 = arith.constant 0 : i32
    %c0_i32_1 = arith.constant 0 : i32
    return %c0_i32, %c0_i32_0 : i32, i32
  }
  func.func @transform_8(%arg0: i32) -> (i32, i32) {
    %c0_i32 = arith.constant 0 : i32
    %c0_i32_0 = arith.constant 0 : i32
    %c0_i32_1 = arith.constant 0 : i32
    return %c0_i32, %c0_i32_0 : i32, i32
  }
  func.func @transform_9(%arg0: i32) -> (i32, i32) {
    %c0_i32 = arith.constant 0 : i32
    %c0_i32_0 = arith.constant 0 : i32
    %c0_i32_1 = arith.constant 0 : i32
    return %c0_i32, %c0_i32_0 : i32, i32
  }
  func.func @transform_10(%arg0: i32) -> (i32, i32) {
    %c0_i32 = arith.constant 0 : i32
    %c0_i32_0 = arith.constant 0 : i32
    return %arg0, %c0_i32 : i32, i32
  }
  func.func @transform_11(%arg0: i32) -> (i32, i32) {
    %c0_i32 = arith.constant 0 : i32
    %c0_i32_0 = arith.constant 0 : i32
    return %arg0, %c0_i32 : i32, i32
  }
  func.func @transform_12(%arg0: i32) -> (i32, i32) {
    %c0_i32 = arith.constant 0 : i32
    %c0_i32_0 = arith.constant 0 : i32
    return %arg0, %c0_i32 : i32, i32
  }
}

</mosaic_0001>

<llo_original>
// kernel: tpu_custom_call.1
$region0: #{tpu_custom_call.1}
  #allocation0 [shape = 'u32[]', space=smem, size = 0x4, offset = 0x4, fixed_abs, tag = 'smem constant byte address 0x4 - core index']
  #allocation1 [shape = 'u32[144,128]{1,0:T(1,128)}', space=vmem, size = 0x12000, scoped, tag = 'internal scratch']
  %s0 = inlined_call_operand.vmem [shape: bf16[32,256], index: 0, kind: input, shape index: {}]
  %s1 = inlined_call_operand.hbm [shape: bf16[256,128], index: 1, kind: input, shape index: {}]
  %s2 = inlined_call_operand.hbm [shape: f32[1,128], index: 2, kind: input, shape index: {}]
  %s3 = inlined_call_operand.hbm [shape: bf16[128,128], index: 3, kind: input, shape index: {}]
  %s4 = inlined_call_operand.hbm [shape: f32[1,128], index: 4, kind: input, shape index: {}]
  %s5 = inlined_call_operand.hbm [shape: bf16[128,384], index: 5, kind: input, shape index: {}]
  %s6 = inlined_call_operand.vmem [shape: f32[1,384], index: 6, kind: input, shape index: {}]
  %s7 = inlined_call_operand.vmem [shape: f32[2,128], index: 7, kind: input, shape index: {}]
  %s8 = inlined_call_operand.vmem [shape: f32[5,128], index: 8, kind: input, shape index: {}]
  %s9 = inlined_call_operand.vmem [shape: f32[2,128], index: 9, kind: input, shape index: {}]
  %s10 = inlined_call_operand.vmem [shape: f32[32,8], index: 10, kind: input, shape index: {}]
  %s11 = inlined_call_operand.hbm [shape: bf16[32,384], index: 11, kind: output, shape index: {0}]
  %s12 = inlined_call_operand.hbm [shape: f32[8,128], index: 12, kind: output, shape index: {1}]
  %13 = xla_tuple %s11, %s12
  %s14 = sld [smem:[#allocation0]]
  $region82: #{tpu_custom_call.1} parent=0
    _
  %s16 = ssub.s32 1, %s14
  %s17 = scalar_select 0, %s16, %s14
  $region1: #{tpu_custom_call.1} parent=0
    #allocation2 [shape = 'u8[65536]{0}', space=vmem, size = 0x10000, scoped, tag = 'input window, operand 1, single buffered']
    #allocation3 [shape = 's32[1]{0}', space=sflag, size = 0x4, scoped, tag = 'scoped memory for tpu_custom_call.1']
    #allocation4 [shape = 's32[1]{0}', space=sflag, size = 0x4, scoped, tag = 'scoped memory for tpu_custom_call.1']
    #allocation5 [shape = 'u8[512]{0}', space=vmem, size = 0x400, scoped, tag = 'input window, operand 2, single buffered']
    #allocation6 [shape = 's32[1]{0}', space=sflag, size = 0x4, scoped, tag = 'scoped memory for tpu_custom_call.1']
    #allocation7 [shape = 'u8[32768]{0}', space=vmem, size = 0x8000, scoped, tag = 'input window, operand 3, single buffered']
    #allocation8 [shape = 'u8[512]{0}', space=vmem, size = 0x400, scoped, tag = 'input window, operand 4, single buffered']
    #allocation9 [shape = 's32[1]{0}', space=sflag, size = 0x4, scoped, tag = 'scoped memory for tpu_custom_call.1']
    #allocation10 [shape = 'u8[98304]{0}', space=vmem, size = 0x18000, scoped, tag = 'input window, operand 5, single buffered']
    #allocation11 [shape = 'u8[24576]{0}', space=vmem, size = 0x6000, scoped, tag = 'output window, operand 0, single buffered']
    #allocation12 [shape = 'u8[4096]{0}', space=vmem, size = 0x1000, scoped, tag = 'output window, operand 1, single buffered']
    #allocation13 [shape = 's32[1]{0}', space=sflag, size = 0x4, scoped, tag = 'scoped memory for tpu_custom_call.1']
    %18 = vsyncpa [#allocation3], 0
    %19 = vsyncpa [#allocation6], 0
    %20 = vsyncpa [#allocation9], 0
    %21 = vsyncpa [#allocation4], 0
    %22 = vsyncpa [#allocation13], 0
    // Predicated region
    $region2: #{tpu_custom_call.1} parent=1 // pred_check
      _
    $region3: #{tpu_custom_call.1} parent=1 // pred_check_branch
      %24 = sbr.rel (0) target = $region5
    $region4: #{tpu_custom_call.1} parent=1 // pred_region
      _
    $region5: #{tpu_custom_call.1} parent=1 // pred_fallthru
      _
    // Predicated region
    $region6: #{tpu_custom_call.1} parent=1 // pred_check
      _
    $region7: #{tpu_custom_call.1} parent=1 // pred_check_branch
      %26 = sbr.rel (0) target = $region9
    $region8: #{tpu_custom_call.1} parent=1 // pred_region
      %s28 = ssub.s32 2048, 2048
      %29 = vsyncadd [#allocation3], %s28
      %s30 = sshll.u32 [#allocation2], 4
      %s31 = int_to_ptr.vmem [resolvable:$true] %s30
      %36 = dma.hbm_to_vmem [thread:$0]  %s1, 2048, %s31, [#allocation3], 64, 64, 4
    $region9: #{tpu_custom_call.1} parent=1 // pred_fallthru
      _
    // Predicated region
    $region10: #{tpu_custom_call.1} parent=1 // pred_check
      _
    $region11: #{tpu_custom_call.1} parent=1 // pred_check_branch
      %38 = sbr.rel (0) target = $region13
    $region12: #{tpu_custom_call.1} parent=1 // pred_region
      %s40 = ssub.s32 16, 16
      %41 = vsyncadd [#allocation6], %s40
      %s43 = sshll.u32 [#allocation5], 4
      %s44 = int_to_ptr.vmem [resolvable:$true] %s43
      %46 = dma.hbm_to_vmem [thread:$0]  %s2, 16, %s44, [#allocation6]
    $region13: #{tpu_custom_call.1} parent=1 // pred_fallthru
      _
    // Predicated region
    $region14: #{tpu_custom_call.1} parent=1 // pred_check
      _
    $region15: #{tpu_custom_call.1} parent=1 // pred_check_branch
      %48 = sbr.rel (0) target = $region17
    $region16: #{tpu_custom_call.1} parent=1 // pred_region
      %s50 = ssub.s32 1024, 1024
      %51 = vsyncadd [#allocation6], %s50
      %s52 = sshll.u32 [#allocation7], 4
      %s53 = int_to_ptr.vmem [resolvable:$true] %s52
      %58 = dma.hbm_to_vmem [thread:$0]  %s3, 1024, %s53, [#allocation6], 64, 64, 4
    $region17: #{tpu_custom_call.1} parent=1 // pred_fallthru
      _
    // Predicated region
    $region18: #{tpu_custom_call.1} parent=1 // pred_check
      _
    $region19: #{tpu_custom_call.1} parent=1 // pred_check_branch
      %60 = sbr.rel (0) target = $region21
    $region20: #{tpu_custom_call.1} parent=1 // pred_region
      %s62 = ssub.s32 16, 16
      %63 = vsyncadd [#allocation9], %s62
      %s65 = sshll.u32 [#allocation8], 4
      %s66 = int_to_ptr.vmem [resolvable:$true] %s65
      %68 = dma.hbm_to_vmem [thread:$0]  %s4, 16, %s66, [#allocation9]
    $region21: #{tpu_custom_call.1} parent=1 // pred_fallthru
      _
    // Predicated region
    $region22: #{tpu_custom_call.1} parent=1 // pred_check
      _
    $region23: #{tpu_custom_call.1} parent=1 // pred_check_branch
      %70 = sbr.rel (0) target = $region25
    $region24: #{tpu_custom_call.1} parent=1 // pred_region
      %s72 = ssub.s32 3072, 3072
      %73 = vsyncadd [#allocation9], %s72
      %s74 = sshll.u32 [#allocation10], 4
      %s75 = int_to_ptr.vmem [resolvable:$true] %s74
      %80 = dma.hbm_to_vmem [thread:$0]  %s5, 3072, %s75, [#allocation9], 192, 192, 12
    $region25: #{tpu_custom_call.1} parent=1 // pred_fallthru
      _
    // Predicated region
    $region26: #{tpu_custom_call.1} parent=1 // pred_check
      _
    $region27: #{tpu_custom_call.1} parent=1 // pred_check_branch
      %82 = sbr.rel (0) target = $region29
    $region28: #{tpu_custom_call.1} parent=1 // pred_region
      _
    $region29: #{tpu_custom_call.1} parent=1 // pred_fallthru
      _
    // Predicated region
    $region30: #{tpu_custom_call.1} parent=1 // pred_check
      _
    $region31: #{tpu_custom_call.1} parent=1 // pred_check_branch
      %84 = sbr.rel (0) target = $region33
    $region32: #{tpu_custom_call.1} parent=1 // pred_region
      _
    $region33: #{tpu_custom_call.1} parent=1 // pred_fallthru
      _
    // Predicated region
    $region34: #{tpu_custom_call.1} parent=1 // pred_check
      _
    $region35: #{tpu_custom_call.1} parent=1 // pred_check_branch
      %86 = sbr.rel (0) target = $region37
    $region36: #{tpu_custom_call.1} parent=1 // pred_region
      _
    $region37: #{tpu_custom_call.1} parent=1 // pred_fallthru
      _
    // Predicated region
    $region38: #{tpu_custom_call.1} parent=1 // pred_check
      _
    $region39: #{tpu_custom_call.1} parent=1 // pred_check_branch
      %88 = sbr.rel (0) target = $region41
    $region40: #{tpu_custom_call.1} parent=1 // pred_region
      _
    $region41: #{tpu_custom_call.1} parent=1 // pred_fallthru
      _
    // Predicated region
    $region42: #{tpu_custom_call.1} parent=1 // pred_check
      _
    $region43: #{tpu_custom_call.1} parent=1 // pred_check_branch
      %90 = sbr.rel (0) target = $region45
    $region44: #{tpu_custom_call.1} parent=1 // pred_region
      _
    $region45: #{tpu_custom_call.1} parent=1 // pred_fallthru
      _
    // Predicated region
    $region46: #{tpu_custom_call.1} parent=1 // pred_check
      _
    $region47: #{tpu_custom_call.1} parent=1 // pred_check_branch
      %92 = sbr.rel (0) target = $region49
    $region48: #{tpu_custom_call.1} parent=1 // pred_region
      %93 = dma.done [#allocation3], 2048
    $region49: #{tpu_custom_call.1} parent=1 // pred_fallthru
      _
    // Predicated region
    $region50: #{tpu_custom_call.1} parent=1 // pred_check
      _
    $region51: #{tpu_custom_call.1} parent=1 // pred_check_branch
      %95 = sbr.rel (0) target = $region53
    $region52: #{tpu_custom_call.1} parent=1 // pred_region
      %96 = dma.done [#allocation6], 16
    $region53: #{tpu_custom_call.1} parent=1 // pred_fallthru
      _
    // Predicated region
    $region54: #{tpu_custom_call.1} parent=1 // pred_check
      _
    $region55: #{tpu_custom_call.1} parent=1 // pred_check_branch
      %98 = sbr.rel (0) target = $region57
    $region56: #{tpu_custom_call.1} parent=1 // pred_region
      %99 = dma.done [#allocation6], 1024
    $region57: #{tpu_custom_call.1} parent=1 // pred_fallthru
      _
    // Predicated region
    $region58: #{tpu_custom_call.1} parent=1 // pred_check
      _
    $region59: #{tpu_custom_call.1} parent=1 // pred_check_branch
      %101 = sbr.rel (0) target = $region61
    $region60: #{tpu_custom_call.1} parent=1 // pred_region
      %102 = dma.done [#allocation9], 16
    $region61: #{tpu_custom_call.1} parent=1 // pred_fallthru
      _
    // Predicated region
    $region62: #{tpu_custom_call.1} parent=1 // pred_check
      _
    $region63: #{tpu_custom_call.1} parent=1 // pred_check_branch
      %104 = sbr.rel (0) target = $region65
    $region64: #{tpu_custom_call.1} parent=1 // pred_region
      %105 = dma.done [#allocation9], 3072
    $region65: #{tpu_custom_call.1} parent=1 // pred_fallthru
      _
    %v107 = vld [vmem:[%s0] sm:$0xff]
    %v108 = vld [vmem:[%s0 + $0x8] sm:$0xff]
    %v109 = vld [vmem:[%s0 + $0x10] sm:$0xff]
    %v110 = vld [vmem:[%s0 + $0x18] sm:$0xff]
    %v111 = vld [vmem:[#allocation2] sm:$0xf]
    %v112 = vld [vmem:[#allocation2 + $0x4] sm:$0xf]
    %v113 = vld [vmem:[#allocation2 + $0x8] sm:$0xf]
    %v114 = vld [vmem:[#allocation2 + $0xc] sm:$0xf]
    %v115 = vld [vmem:[#allocation2 + $0x10] sm:$0xf]
    %v116 = vld [vmem:[#allocation2 + $0x14] sm:$0xf]
    %v117 = vld [vmem:[#allocation2 + $0x18] sm:$0xf]
    %v118 = vld [vmem:[#allocation2 + $0x1c] sm:$0xf]
    %v119 = vld [vmem:[#allocation2 + $0x20] sm:$0xf]
    %v120 = vld [vmem:[#allocation2 + $0x24] sm:$0xf]
    %v121 = vld [vmem:[#allocation2 + $0x28] sm:$0xf]
    %v122 = vld [vmem:[#allocation2 + $0x2c] sm:$0xf]
    %v123 = vld [vmem:[#allocation2 + $0x30] sm:$0xf]
    %v124 = vld [vmem:[#allocation2 + $0x34] sm:$0xf]
    %v125 = vld [vmem:[#allocation2 + $0x38] sm:$0xf]
    %v126 = vld [vmem:[#allocation2 + $0x3c] sm:$0xf]
    %v127 = vld [vmem:[#allocation2 + $0x40] sm:$0xf]
    %v128 = vld [vmem:[#allocation2 + $0x44] sm:$0xf]
    %v129 = vld [vmem:[#allocation2 + $0x48] sm:$0xf]
    %v130 = vld [vmem:[#allocation2 + $0x4c] sm:$0xf]
    %v131 = vld [vmem:[#allocation2 + $0x50] sm:$0xf]
    %v132 = vld [vmem:[#allocation2 + $0x54] sm:$0xf]
    %v133 = vld [vmem:[#allocation2 + $0x58] sm:$0xf]
    %v134 = vld [vmem:[#allocation2 + $0x5c] sm:$0xf]
    %v135 = vld [vmem:[#allocation2 + $0x60] sm:$0xf]
    %v136 = vld [vmem:[#allocation2 + $0x64] sm:$0xf]
    %v137 = vld [vmem:[#allocation2 + $0x68] sm:$0xf]
    %v138 = vld [vmem:[#allocation2 + $0x6c] sm:$0xf]
    %v139 = vld [vmem:[#allocation2 + $0x70] sm:$0xf]
    %v140 = vld [vmem:[#allocation2 + $0x74] sm:$0xf]
    %v141 = vld [vmem:[#allocation2 + $0x78] sm:$0xf]
    %v142 = vld [vmem:[#allocation2 + $0x7c] sm:$0xf]
    %v143 = vld [vmem:[#allocation5] sm:$0x1]
    %v144 = vld [vmem:[#allocation7] sm:$0xf]
    %v145 = vld [vmem:[#allocation7 + $0x4] sm:$0xf]
    %v146 = vld [vmem:[#allocation7 + $0x8] sm:$0xf]
    %v147 = vld [vmem:[#allocation7 + $0xc] sm:$0xf]
    %v148 = vld [vmem:[#allocation7 + $0x10] sm:$0xf]
    %v149 = vld [vmem:[#allocation7 + $0x14] sm:$0xf]
    %v150 = vld [vmem:[#allocation7 + $0x18] sm:$0xf]
    %v151 = vld [vmem:[#allocation7 + $0x1c] sm:$0xf]
    %v152 = vld [vmem:[#allocation7 + $0x20] sm:$0xf]
    %v153 = vld [vmem:[#allocation7 + $0x24] sm:$0xf]
    %v154 = vld [vmem:[#allocation7 + $0x28] sm:$0xf]
    %v155 = vld [vmem:[#allocation7 + $0x2c] sm:$0xf]
    %v156 = vld [vmem:[#allocation7 + $0x30] sm:$0xf]
    %v157 = vld [vmem:[#allocation7 + $0x34] sm:$0xf]
    %v158 = vld [vmem:[#allocation7 + $0x38] sm:$0xf]
    %v159 = vld [vmem:[#allocation7 + $0x3c] sm:$0xf]
    %v160 = vld [vmem:[#allocation8] sm:$0x1]
    %v161 = vld [vmem:[#allocation10] sm:$0xff]
    %v162 = vld [vmem:[#allocation10 + $0x8] sm:$0xf]
    %v163 = vld [vmem:[#allocation10 + $0xc] sm:$0xff]
    %v164 = vld [vmem:[#allocation10 + $0x14] sm:$0xf]
    %v165 = vld [vmem:[#allocation10 + $0x18] sm:$0xff]
    %v166 = vld [vmem:[#allocation10 + $0x20] sm:$0xf]
    %v167 = vld [vmem:[#allocation10 + $0x24] sm:$0xff]
    %v168 = vld [vmem:[#allocation10 + $0x2c] sm:$0xf]
    %v169 = vld [vmem:[#allocation10 + $0x30] sm:$0xff]
    %v170 = vld [vmem:[#allocation10 + $0x38] sm:$0xf]
    %v171 = vld [vmem:[#allocation10 + $0x3c] sm:$0xff]
    %v172 = vld [vmem:[#allocation10 + $0x44] sm:$0xf]
    %v173 = vld [vmem:[#allocation10 + $0x48] sm:$0xff]
    %v174 = vld [vmem:[#allocation10 + $0x50] sm:$0xf]
    %v175 = vld [vmem:[#allocation10 + $0x54] sm:$0xff]
    %v176 = vld [vmem:[#allocation10 + $0x5c] sm:$0xf]
    %v177 = vld [vmem:[#allocation10 + $0x60] sm:$0xff]
    %v178 = vld [vmem:[#allocation10 + $0x68] sm:$0xf]
    %v179 = vld [vmem:[#allocation10 + $0x6c] sm:$0xff]
    %v180 = vld [vmem:[#allocation10 + $0x74] sm:$0xf]
    %v181 = vld [vmem:[#allocation10 + $0x78] sm:$0xff]
    %v182 = vld [vmem:[#allocation10 + $0x80] sm:$0xf]
    %v183 = vld [vmem:[#allocation10 + $0x84] sm:$0xff]
    %v184 = vld [vmem:[#allocation10 + $0x8c] sm:$0xf]
    %v185 = vld [vmem:[#allocation10 + $0x90] sm:$0xff]
    %v186 = vld [vmem:[#allocation10 + $0x98] sm:$0xf]
    %v187 = vld [vmem:[#allocation10 + $0x9c] sm:$0xff]
    %v188 = vld [vmem:[#allocation10 + $0xa4] sm:$0xf]
    %v189 = vld [vmem:[#allocation10 + $0xa8] sm:$0xff]
    %v190 = vld [vmem:[#allocation10 + $0xb0] sm:$0xf]
    %v191 = vld [vmem:[#allocation10 + $0xb4] sm:$0xff]
    %v192 = vld [vmem:[#allocation10 + $0xbc] sm:$0xf]
    %v193 = vld [vmem:[%s6] sm:$0x7]
    %v194 = vld [vmem:[%s7] sm:$0x3]
    %v195 = vld [vmem:[%s8] sm:$0x1f]
    %v196 = vld [vmem:[%s9] sm:$0x3]
    %v197 = vld [vmem:[%s10] sm:$0xff]
    %v198 = vld [vmem:[%s10 + $0x8] sm:$0xff]
    %v199 = vld [vmem:[%s10 + $0x10] sm:$0xff]
    %v200 = vld [vmem:[%s10 + $0x18] sm:$0xff]
    %v202 = vlaneseq
    %v203 = vshrl.u32 %v202, 7
    %v204 = vsub.s32 0, %v203
    %v205 = vrot.slane %v143, %v204
    %v211 = vunpack.c.l.b16 %v107
    %v212 = vunpack.c.h.b16 %v107
    %v213 = vunpack.c.l.b16 %v108
    %v214 = vunpack.c.h.b16 %v108
    %v215 = vunpack.c.l.b16 %v109
    %v216 = vunpack.c.h.b16 %v109
    %v217 = vunpack.c.l.b16 %v110
    %v218 = vunpack.c.h.b16 %v110
    %v219 = vpack.c.b16 %v213, %v211
    %v220 = vpack.c.b16 %v214, %v212
    %v221 = vpack.c.b16 %v217, %v215
    %v222 = vpack.c.b16 %v218, %v216
    %v259 = vunpack.c.l.b16 %v111
    %v260 = vunpack.c.l.b16 %v112
    %v261 = vunpack.c.l.b16 %v113
    %v262 = vunpack.c.l.b16 %v114
    %v263 = vunpack.c.l.b16 %v115
    %v264 = vunpack.c.l.b16 %v116
    %v265 = vunpack.c.l.b16 %v117
    %v266 = vunpack.c.l.b16 %v118
    %v267 = vunpack.c.l.b16 %v119
    %v268 = vunpack.c.l.b16 %v120
    %v269 = vunpack.c.l.b16 %v121
    %v270 = vunpack.c.l.b16 %v122
    %v271 = vunpack.c.l.b16 %v123
    %v272 = vunpack.c.l.b16 %v124
    %v273 = vunpack.c.l.b16 %v125
    %v274 = vunpack.c.l.b16 %v126
    %v275 = vunpack.c.l.b16 %v127
    %v276 = vunpack.c.l.b16 %v128
    %v277 = vunpack.c.l.b16 %v129
    %v278 = vunpack.c.l.b16 %v130
    %v279 = vunpack.c.l.b16 %v131
    %v280 = vunpack.c.l.b16 %v132
    %v281 = vunpack.c.l.b16 %v133
    %v282 = vunpack.c.l.b16 %v134
    %v283 = vunpack.c.l.b16 %v135
    %v284 = vunpack.c.l.b16 %v136
    %v285 = vunpack.c.l.b16 %v137
    %v286 = vunpack.c.l.b16 %v138
    %v287 = vunpack.c.l.b16 %v139
    %v288 = vunpack.c.l.b16 %v140
    %v289 = vunpack.c.l.b16 %v141
    %v290 = vunpack.c.l.b16 %v142
    %v291 = vpack.c.b16 %v260, %v259
    %v292 = vpack.c.b16 %v262, %v261
    %v293 = vpack.c.b16 %v264, %v263
    %v294 = vpack.c.b16 %v266, %v265
    %v295 = vpack.c.b16 %v268, %v267
    %v296 = vpack.c.b16 %v270, %v269
    %v297 = vpack.c.b16 %v272, %v271
    %v298 = vpack.c.b16 %v274, %v273
    %v299 = vpack.c.b16 %v276, %v275
    %v300 = vpack.c.b16 %v278, %v277
    %v301 = vpack.c.b16 %v280, %v279
    %v302 = vpack.c.b16 %v282, %v281
    %v303 = vpack.c.b16 %v284, %v283
    %v304 = vpack.c.b16 %v286, %v285
    %v305 = vpack.c.b16 %v288, %v287
    %v306 = vpack.c.b16 %v290, %v289
    %323 = vmatprep.subr.bf16.mxu0 0
    %324 = vmatpush1.bf16.msra.mxu0 %v291
    %325 = vmatprep.subr.bf16.mxu0 0
    %326 = vmatpush1.bf16.msra.mxu0 %v292
    %327 = vmatprep.subr.bf16.mxu0 0
    %328 = vmatpush1.bf16.msra.mxu0 %v293
    %329 = vmatprep.subr.bf16.mxu0 0
    %330 = vmatpush1.bf16.msra.mxu0 %v294
    %331 = vmatprep.subr.bf16.mxu0 0
    %332 = vmatpush1.bf16.msra.mxu0 %v295
    %333 = vmatprep.subr.bf16.mxu0 0
    %334 = vmatpush1.bf16.msra.mxu0 %v296
    %335 = vmatprep.subr.bf16.mxu0 0
    %336 = vmatpush1.bf16.msra.mxu0 %v297
    %337 = vmatprep.subr.bf16.mxu0 0
    %338 = vmatpush1.bf16.msra.mxu0 %v298
    %339 = vmatprep.subr.bf16.mxu0 0
    %340 = vmatpush1.bf16.msra.mxu0 %v299
    %341 = vmatprep.subr.bf16.mxu0 0
    %342 = vmatpush1.bf16.msra.mxu0 %v300
    %343 = vmatprep.subr.bf16.mxu0 0
    %344 = vmatpush1.bf16.msra.mxu0 %v301
    %345 = vmatprep.subr.bf16.mxu0 0
    %346 = vmatpush1.bf16.msra.mxu0 %v302
    %347 = vmatprep.subr.bf16.mxu0 0
    %348 = vmatpush1.bf16.msra.mxu0 %v303
    %349 = vmatprep.subr.bf16.mxu0 0
    %350 = vmatpush1.bf16.msra.mxu0 %v304
    %351 = vmatprep.subr.bf16.mxu0 0
    %352 = vmatpush1.bf16.msra.mxu0 %v305
    %353 = vmatprep.subr.bf16.mxu0 0
    %354 = vmatpush1.bf16.msra.mxu0 %v306
    %355 = vmatprep.mubr.bf16.mxu0 %v220
    %356 = vmatmul.mubr.bf16.gmra.mrb[0].mxu0 %v219
    %v357 = vpop.f32.mrb[0].mxu0
    %v358 = vadd.f32 %v205, %v357
    %v359 = vpop.f32.mrb[0].mxu0
    %v360 = vpop.f32.mrb[0].mxu0
    %v361 = vadd.f32 %v205, %v360
    %v362 = vpop.f32.mrb[0].mxu0
    %363 = vmatprep.mubr.bf16.mxu0 %v222
    %364 = vmatmul.mubr.bf16.gmra.mrb[0].mxu0 %v221
    %v365 = vpop.f32.mrb[0].mxu0
    %v366 = vadd.f32 %v205, %v365
    %v367 = vpop.f32.mrb[0].mxu0
    %v368 = vpop.f32.mrb[0].mxu0
    %v369 = vadd.f32 %v205, %v368
    %v370 = vpop.f32.mrb[0].mxu0
    %371 = vdwg.mxu0
    %v372 = vmax.f32 %v358, 0.0
    %v373 = vmax.f32 %v361, 0.0
    %v374 = vmax.f32 %v366, 0.0
    %v375 = vmax.f32 %v369, 0.0
    %v376 = vpack.c.bf16 %v373, %v372
    %v377 = vpack.c.bf16 %v375, %v374
    %v379 = vlaneseq
    %v380 = vshrl.u32 %v379, 7
    %v381 = vsub.s32 0, %v380
    %v382 = vrot.slane %v160, %v381
    %v400 = vunpack.c.l.b16 %v144
    %v401 = vunpack.c.l.b16 %v145
    %v402 = vunpack.c.l.b16 %v146
    %v403 = vunpack.c.l.b16 %v147
    %v404 = vunpack.c.l.b16 %v148
    %v405 = vunpack.c.l.b16 %v149
    %v406 = vunpack.c.l.b16 %v150
    %v407 = vunpack.c.l.b16 %v151
    %v408 = vunpack.c.l.b16 %v152
    %v409 = vunpack.c.l.b16 %v153
    %v410 = vunpack.c.l.b16 %v154
    %v411 = vunpack.c.l.b16 %v155
    %v412 = vunpack.c.l.b16 %v156
    %v413 = vunpack.c.l.b16 %v157
    %v414 = vunpack.c.l.b16 %v158
    %v415 = vunpack.c.l.b16 %v159
    %v416 = vpack.c.b16 %v401, %v400
    %v417 = vpack.c.b16 %v403, %v402
    %v418 = vpack.c.b16 %v405, %v404
    %v419 = vpack.c.b16 %v407, %v406
    %v420 = vpack.c.b16 %v409, %v408
    %v421 = vpack.c.b16 %v411, %v410
    %v422 = vpack.c.b16 %v413, %v412
    %v423 = vpack.c.b16 %v415, %v414
    %432 = vmatprep.subr.bf16.mxu0 0
    %433 = vmatpush1.bf16.msra.mxu0 %v416
    %434 = vmatprep.subr.bf16.mxu0 0
    %435 = vmatpush1.bf16.msra.mxu0 %v417
    %436 = vmatprep.subr.bf16.mxu0 0
    %437 = vmatpush1.bf16.msra.mxu0 %v418
    %438 = vmatprep.subr.bf16.mxu0 0
    %439 = vmatpush1.bf16.msra.mxu0 %v419
    %440 = vmatprep.subr.bf16.mxu0 0
    %441 = vmatpush1.bf16.msra.mxu0 %v420
    %442 = vmatprep.subr.bf16.mxu0 0
    %443 = vmatpush1.bf16.msra.mxu0 %v421
    %444 = vmatprep.subr.bf16.mxu0 0
    %445 = vmatpush1.bf16.msra.mxu0 %v422
    %446 = vmatprep.subr.bf16.mxu0 0
    %447 = vmatpush1.bf16.msra.mxu0 %v423
    %448 = vmatprep.subr.bf16.mxu0 0
    %449 = vmatpush1.bf16.msra.mxu0 0
    %450 = vmatprep.subr.bf16.mxu0 0
    %451 = vmatpush1.bf16.msra.mxu0 0
    %452 = vmatprep.subr.bf16.mxu0 0
    %453 = vmatpush1.bf16.msra.mxu0 0
    %454 = vmatprep.subr.bf16.mxu0 0
    %455 = vmatpush1.bf16.msra.mxu0 0
    %456 = vmatprep.subr.bf16.mxu0 0
    %457 = vmatpush1.bf16.msra.mxu0 0
    %458 = vmatprep.subr.bf16.mxu0 0
    %459 = vmatpush1.bf16.msra.mxu0 0
    %460 = vmatprep.subr.bf16.mxu0 0
    %461 = vmatpush1.bf16.msra.mxu0 0
    %462 = vmatprep.subr.bf16.mxu0 0
    %463 = vmatpush1.bf16.msra.mxu0 0
    %464 = vmatprep.mubr.bf16.mxu0 0
    %465 = vmatmul.mubr.bf16.gmra.mrb[0].mxu0 %v376
    %v466 = vpop.f32.mrb[0].mxu0
    %v467 = vadd.f32 %v382, %v466
    %v468 = vpop.f32.mrb[0].mxu0
    %v469 = vpop.f32.mrb[0].mxu0
    %v470 = vadd.f32 %v382, %v469
    %v471 = vpop.f32.mrb[0].mxu0
    %472 = vmatprep.mubr.bf16.mxu0 0
    %473 = vmatmul.mubr.bf16.gmra.mrb[0].mxu0 %v377
    %v474 = vpop.f32.mrb[0].mxu0
    %v475 = vadd.f32 %v382, %v474
    %v476 = vpop.f32.mrb[0].mxu0
    %v477 = vpop.f32.mrb[0].mxu0
    %v478 = vadd.f32 %v382, %v477
    %v479 = vpop.f32.mrb[0].mxu0
    %480 = vdwg.mxu0
    %v481 = vmax.f32 %v467, 0.0
    %v482 = vmax.f32 %v470, 0.0
    %v483 = vmax.f32 %v475, 0.0
    %v484 = vmax.f32 %v478, 0.0
    %v485 = vpack.c.bf16 %v482, %v481
    %v486 = vpack.c.bf16 %v484, %v483
    %v488 = vlaneseq
    %v489 = vshrl.u32 %v488, 7
    %v490 = vsub.s32 0, %v489
    %v491 = vrot.slane %v193, %v490
    %v492 = vlaneseq
    %v493 = vshrl.u32 %v492, 7
    %v494 = vsub.s32 1, %v493
    %v495 = vrot.slane %v193, %v494
    %v496 = vlaneseq
    %v497 = vshrl.u32 %v496, 7
    %v498 = vsub.s32 2, %v497
    %v499 = vrot.slane %v193, %v498
    %v535 = vunpack.c.l.b16 %v161
    %v536 = vunpack.c.h.b16 %v161
    %v537 = vunpack.c.l.b16 %v162
    %v538 = vunpack.c.l.b16 %v163
    %v539 = vunpack.c.h.b16 %v163
    %v540 = vunpack.c.l.b16 %v164
    %v541 = vunpack.c.l.b16 %v165
    %v542 = vunpack.c.h.b16 %v165
    %v543 = vunpack.c.l.b16 %v166
    %v544 = vunpack.c.l.b16 %v167
    %v545 = vunpack.c.h.b16 %v167
    %v546 = vunpack.c.l.b16 %v168
    %v547 = vunpack.c.l.b16 %v169
    %v548 = vunpack.c.h.b16 %v169
    %v549 = vunpack.c.l.b16 %v170
    %v550 = vunpack.c.l.b16 %v171
    %v551 = vunpack.c.h.b16 %v171
    %v552 = vunpack.c.l.b16 %v172
    %v553 = vunpack.c.l.b16 %v173
    %v554 = vunpack.c.h.b16 %v173
    %v555 = vunpack.c.l.b16 %v174
    %v556 = vunpack.c.l.b16 %v175
    %v557 = vunpack.c.h.b16 %v175
    %v558 = vunpack.c.l.b16 %v176
    %v559 = vunpack.c.l.b16 %v177
    %v560 = vunpack.c.h.b16 %v177
    %v561 = vunpack.c.l.b16 %v178
    %v562 = vunpack.c.l.b16 %v179
    %v563 = vunpack.c.h.b16 %v179
    %v564 = vunpack.c.l.b16 %v180
    %v565 = vunpack.c.l.b16 %v181
    %v566 = vunpack.c.h.b16 %v181
    %v567 = vunpack.c.l.b16 %v182
    %v568 = vunpack.c.l.b16 %v183
    %v569 = vunpack.c.h.b16 %v183
    %v570 = vunpack.c.l.b16 %v184
    %v571 = vunpack.c.l.b16 %v185
    %v572 = vunpack.c.h.b16 %v185
    %v573 = vunpack.c.l.b16 %v186
    %v574 = vunpack.c.l.b16 %v187
    %v575 = vunpack.c.h.b16 %v187
    %v576 = vunpack.c.l.b16 %v188
    %v577 = vunpack.c.l.b16 %v189
    %v578 = vunpack.c.h.b16 %v189
    %v579 = vunpack.c.l.b16 %v190
    %v580 = vunpack.c.l.b16 %v191
    %v581 = vunpack.c.h.b16 %v191
    %v582 = vunpack.c.l.b16 %v192
    %v583 = vpack.c.b16 %v538, %v535
    %v584 = vpack.c.b16 %v539, %v536
    %v585 = vpack.c.b16 %v540, %v537
    %v586 = vpack.c.b16 %v544, %v541
    %v587 = vpack.c.b16 %v545, %v542
    %v588 = vpack.c.b16 %v546, %v543
    %v589 = vpack.c.b16 %v550, %v547
    %v590 = vpack.c.b16 %v551, %v548
    %v591 = vpack.c.b16 %v552, %v549
    %v592 = vpack.c.b16 %v556, %v553
    %v593 = vpack.c.b16 %v557, %v554
    %v594 = vpack.c.b16 %v558, %v555
    %v595 = vpack.c.b16 %v562, %v559
    %v596 = vpack.c.b16 %v563, %v560
    %v597 = vpack.c.b16 %v564, %v561
    %v598 = vpack.c.b16 %v568, %v565
    %v599 = vpack.c.b16 %v569, %v566
    %v600 = vpack.c.b16 %v570, %v567
    %v601 = vpack.c.b16 %v574, %v571
    %v602 = vpack.c.b16 %v575, %v572
    %v603 = vpack.c.b16 %v576, %v573
    %v604 = vpack.c.b16 %v580, %v577
    %v605 = vpack.c.b16 %v581, %v578
    %v606 = vpack.c.b16 %v582, %v579
    %631 = vmatprep.subr.bf16.mxu0 %v584
    %632 = vmatpush1.bf16.msra.mxu0 %v583
    %633 = vmatprep.subr.bf16.mxu0 %v587
    %634 = vmatpush1.bf16.msra.mxu0 %v586
    %635 = vmatprep.subr.bf16.mxu0 %v590
    %636 = vmatpush1.bf16.msra.mxu0 %v589
    %637 = vmatprep.subr.bf16.mxu0 %v593
    %638 = vmatpush1.bf16.msra.mxu0 %v592
    %639 = vmatprep.subr.bf16.mxu0 %v596
    %640 = vmatpush1.bf16.msra.mxu0 %v595
    %641 = vmatprep.subr.bf16.mxu0 %v599
    %642 = vmatpush1.bf16.msra.mxu0 %v598
    %643 = vmatprep.subr.bf16.mxu0 %v602
    %644 = vmatpush1.bf16.msra.mxu0 %v601
    %645 = vmatprep.subr.bf16.mxu0 %v605
    %646 = vmatpush1.bf16.msra.mxu0 %v604
    %647 = vmatprep.subr.bf16.mxu0 0
    %648 = vmatpush1.bf16.msra.mxu0 0
    %649 = vmatprep.subr.bf16.mxu0 0
    %650 = vmatpush1.bf16.msra.mxu0 0
    %651 = vmatprep.subr.bf16.mxu0 0
    %652 = vmatpush1.bf16.msra.mxu0 0
    %653 = vmatprep.subr.bf16.mxu0 0
    %654 = vmatpush1.bf16.msra.mxu0 0
    %655 = vmatprep.subr.bf16.mxu0 0
    %656 = vmatpush1.bf16.msra.mxu0 0
    %657 = vmatprep.subr.bf16.mxu0 0
    %658 = vmatpush1.bf16.msra.mxu0 0
    %659 = vmatprep.subr.bf16.mxu0 0
    %660 = vmatpush1.bf16.msra.mxu0 0
    %661 = vmatprep.subr.bf16.mxu0 0
    %662 = vmatpush1.bf16.msra.mxu0 0
    %663 = vmatprep.mubr.bf16.mxu0 0
    %664 = vmatmul.mubr.bf16.gmra.mrb[0].mxu0 %v485
    %v665 = vpop.f32.mrb[0].mxu0
    %v666 = vadd.f32 %v491, %v665
    %v667 = vpop.f32.mrb[0].mxu0
    %v668 = vadd.f32 %v495, %v667
    %v669 = vpop.f32.mrb[0].mxu0
    %v670 = vadd.f32 %v491, %v669
    %v671 = vpop.f32.mrb[0].mxu0
    %v672 = vadd.f32 %v495, %v671
    %673 = vmatprep.mubr.bf16.mxu0 0
    %674 = vmatmul.mubr.bf16.gmra.mrb[0].mxu0 %v486
    %v675 = vpop.f32.mrb[0].mxu0
    %v676 = vadd.f32 %v491, %v675
    %v677 = vpop.f32.mrb[0].mxu0
    %v678 = vadd.f32 %v495, %v677
    %v679 = vpop.f32.mrb[0].mxu0
    %v680 = vadd.f32 %v491, %v679
    %v681 = vpop.f32.mrb[0].mxu0
    %v682 = vadd.f32 %v495, %v681
    %683 = vdwg.mxu0
    %684 = vmatprep.subr.bf16.mxu0 0
    %685 = vmatpush1.bf16.msra.mxu0 %v585
    %686 = vmatprep.subr.bf16.mxu0 0
    %687 = vmatpush1.bf16.msra.mxu0 %v588
    %688 = vmatprep.subr.bf16.mxu0 0
    %689 = vmatpush1.bf16.msra.mxu0 %v591
    %690 = vmatprep.subr.bf16.mxu0 0
    %691 = vmatpush1.bf16.msra.mxu0 %v594
    %692 = vmatprep.subr.bf16.mxu0 0
    %693 = vmatpush1.bf16.msra.mxu0 %v597
    %694 = vmatprep.subr.bf16.mxu0 0
    %695 = vmatpush1.bf16.msra.mxu0 %v600
    %696 = vmatprep.subr.bf16.mxu0 0
    %697 = vmatpush1.bf16.msra.mxu0 %v603
    %698 = vmatprep.subr.bf16.mxu0 0
    %699 = vmatpush1.bf16.msra.mxu0 %v606
    %700 = vmatprep.subr.bf16.mxu0 0
    %701 = vmatpush1.bf16.msra.mxu0 0
    %702 = vmatprep.subr.bf16.mxu0 0
    %703 = vmatpush1.bf16.msra.mxu0 0
    %704 = vmatprep.subr.bf16.mxu0 0
    %705 = vmatpush1.bf16.msra.mxu0 0
    %706 = vmatprep.subr.bf16.mxu0 0
    %707 = vmatpush1.bf16.msra.mxu0 0
    %708 = vmatprep.subr.bf16.mxu0 0
    %709 = vmatpush1.bf16.msra.mxu0 0
    %710 = vmatprep.subr.bf16.mxu0 0
    %711 = vmatpush1.bf16.msra.mxu0 0
    %712 = vmatprep.subr.bf16.mxu0 0
    %713 = vmatpush1.bf16.msra.mxu0 0
    %714 = vmatprep.subr.bf16.mxu0 0
    %715 = vmatpush1.bf16.msra.mxu0 0
    %716 = vmatprep.mubr.bf16.mxu0 0
    %717 = vmatmul.mubr.bf16.gmra.mrb[0].mxu0 %v485
    %v718 = vpop.f32.mrb[0].mxu0
    %v719 = vadd.f32 %v499, %v718
    %v720 = vpop.f32.mrb[0].mxu0
    %v721 = vpop.f32.mrb[0].mxu0
    %v722 = vadd.f32 %v499, %v721
    %v723 = vpop.f32.mrb[0].mxu0
    %724 = vmatprep.mubr.bf16.mxu0 0
    %725 = vmatmul.mubr.bf16.gmra.mrb[0].mxu0 %v486
    %v726 = vpop.f32.mrb[0].mxu0
    %v727 = vadd.f32 %v499, %v726
    %v728 = vpop.f32.mrb[0].mxu0
    %v729 = vpop.f32.mrb[0].mxu0
    %v730 = vadd.f32 %v499, %v729
    %v731 = vpop.f32.mrb[0].mxu0
    %732 = vdwg.mxu0
    %vm733 = vcmp.ge.f32.partialorder %v197, 0.0
    %vm734 = vcmp.ge.f32.partialorder %v198, 0.0
    %vm735 = vcmp.ge.f32.partialorder %v199, 0.0
    %vm736 = vcmp.ge.f32.partialorder %v200, 0.0
    %v737 = vsel %vm733, 1, 0
    %v738 = vsel %vm734, 1, 0
    %v739 = vsel %vm735, 1, 0
    %v740 = vsel %vm736, 1, 0
    %v741 = vcvt.s32.f32 %v737
    %v742 = vcvt.s32.f32 %v738
    %v743 = vcvt.s32.f32 %v739
    %v744 = vcvt.s32.f32 %v740
    %vm745 = vcmp.gt.f32.partialorder %v197, 0.0
    %vm746 = vcmp.gt.f32.partialorder %v198, 0.0
    %vm747 = vcmp.gt.f32.partialorder %v199, 0.0
    %vm748 = vcmp.gt.f32.partialorder %v200, 0.0
    %v749 = vsel %vm745, 1, 0
    %v750 = vsel %vm746, 1, 0
    %v751 = vsel %vm747, 1, 0
    %v752 = vsel %vm748, 1, 0
    %v753 = vcvt.s32.f32 %v749
    %v754 = vcvt.s32.f32 %v750
    %v755 = vcvt.s32.f32 %v751
    %v756 = vcvt.s32.f32 %v752
    %v757 = vlaneseq
    %v758 = vshrl.u32 %v757, 7
    %v759 = vsub.s32 0, %v758
    %v760 = vrot.slane %v194, %v759
    %v761 = vadd.f32 %v666, %v760
    %v762 = vadd.f32 %v670, %v760
    %v763 = vadd.f32 %v676, %v760
    %v764 = vadd.f32 %v680, %v760
    %765 = vmax.xlane.f32.xlu0 %v761
    %v766 = vpop.xlane.xlu0 %765
    %767 = vmax.xlane.f32.xlu0 %v762
    %v768 = vpop.xlane.xlu0 %767
    %769 = vmax.xlane.f32.xlu0 %v763
    %v770 = vpop.xlane.xlu0 %769
    %771 = vmax.xlane.f32.xlu0 %v764
    %v772 = vpop.xlane.xlu0 %771
    %v773 = vsub.f32 %v761, %v766
    %v774 = vsub.f32 %v762, %v768
    %v775 = vsub.f32 %v763, %v770
    %v776 = vsub.f32 %v764, %v772
    %v777 = vmul.f32 %v773, 1.442695
    %v778 = vpow.pop %v777
    %v779 = vmul.f32 %v774, 1.442695
    %v780 = vpow.pop %v779
    %v781 = vmul.f32 %v775, 1.442695
    %v782 = vpow.pop %v781
    %v783 = vmul.f32 %v776, 1.442695
    %v784 = vpow.pop %v783
    %785 = vadd.xlane.f32.xlu0 %v778
    %v786 = vpop.xlane.xlu0 %785
    %787 = vadd.xlane.f32.xlu0 %v780
    %v788 = vpop.xlane.xlu0 %787
    %789 = vadd.xlane.f32.xlu0 %v782
    %v790 = vpop.xlane.xlu0 %789
    %791 = vadd.xlane.f32.xlu0 %v784
    %v792 = vpop.xlane.xlu0 %791
    %v793 = vlog2.pop %v786
    %v794 = vmul.f32 %v793, 0.6931472
    %v795 = vlog2.pop %v788
    %v796 = vmul.f32 %v795, 0.6931472
    %v797 = vlog2.pop %v790
    %v798 = vmul.f32 %v797, 0.6931472
    %v799 = vlog2.pop %v792
    %v800 = vmul.f32 %v799, 0.6931472
    %v801 = vadd.f32 %v766, %v794
    %v802 = vadd.f32 %v768, %v796
    %v803 = vadd.f32 %v770, %v798
    %v804 = vadd.f32 %v772, %v800
    %v805 = vlaneseq
    %v806 = vshrl.u32 %v805, 7
    %v807 = vsub.s32 1, %v806
    %v808 = vrot.slane %v194, %v807
    %810 = vset.pattern.permute.xlu0 0
    %811 = vperm.xlu0 %810, %v197
    %v812 = vpop.permute.xlu0 %811
    %815 = vset.pattern.permute.xlu0 0
    %816 = vperm.xlu0 %815, %v198
    %v817 = vpop.permute.xlu0 %816
    %820 = vset.pattern.permute.xlu0 0
    %821 = vperm.xlu0 %820, %v199
    %v822 = vpop.permute.xlu0 %821
    %825 = vset.pattern.permute.xlu0 0
    %826 = vperm.xlu0 %825, %v200
    %v827 = vpop.permute.xlu0 %826
    %vm829 = vcmp.eq.f32.partialorder %v808, %v812
    %vm830 = vcmp.eq.f32.partialorder %v808, %v817
    %vm831 = vcmp.eq.f32.partialorder %v808, %v822
    %vm832 = vcmp.eq.f32.partialorder %v808, %v827
    %v833 = vsel %vm829, %v666, 0.0
    %v834 = vsel %vm830, %v670, 0.0
    %v835 = vsel %vm831, %v676, 0.0
    %v836 = vsel %vm832, %v680, 0.0
    %837 = vadd.xlane.f32.xlu0 %v833
    %v838 = vpop.xlane.xlu0 %837
    %839 = vadd.xlane.f32.xlu0 %v834
    %v840 = vpop.xlane.xlu0 %839
    %841 = vadd.xlane.f32.xlu0 %v835
    %v842 = vpop.xlane.xlu0 %841
    %843 = vadd.xlane.f32.xlu0 %v836
    %v844 = vpop.xlane.xlu0 %843
    %v845 = vsub.f32 %v801, %v838
    %v846 = vsub.f32 %v802, %v840
    %v847 = vsub.f32 %v803, %v842
    %v848 = vsub.f32 %v804, %v844
    %v849 = vmul.f32 %v741, %v845
    %v850 = vmul.f32 %v742, %v846
    %v851 = vmul.f32 %v743, %v847
    %v852 = vmul.f32 %v744, %v848
    %vm853 = vcmask 7168
    %v854 = vsel %vm853, %v849, 0.0
    %v855 = vsel %vm853, %v850, 0.0
    %v856 = vadd.f32 %v854, %v855
    %v857 = vsel %vm853, %v851, 0.0
    %v858 = vadd.f32 %v856, %v857
    %v859 = vsel %vm853, %v852, 0.0
    %v860 = vadd.f32 %v858, %v859
    %861 = vadd.xlane.f32.xlu0 %v860
    %v862 = vpop.xlane.xlu0 %861
    %v863 = vrot.slane %v862, 4
    %v864 = vadd.f32 %v862, %v863
    %v865 = vrot.slane %v864, 2
    %v866 = vadd.f32 %v864, %v865
    %v867 = vrot.slane %v866, 1
    %v868 = vadd.f32 %v866, %v867
    %s869 = vtos %v868
    %870 = vrot.lane.b32.xlu0 %v197, 127
    %v871 = vpop.permute.xlu0 %870
    %872 = vrot.lane.b32.xlu0 %v198, 127
    %v873 = vpop.permute.xlu0 %872
    %874 = vrot.lane.b32.xlu0 %v199, 127
    %v875 = vpop.permute.xlu0 %874
    %876 = vrot.lane.b32.xlu0 %v200, 127
    %v877 = vpop.permute.xlu0 %876
    %v879 = vrot.slane %v195, 1
    %vm880 = vcmask 31744
    %v881 = vsel %vm880, %v871, 0
    %v883 = vsel %vm880, %v873, 0
    %v885 = vsel %vm880, %v875, 0
    %v887 = vsel %vm880, %v877, 0
    %vm889 = vcmask 1043456
    %v890 = vsel %vm889, %v879, 0
    %892 = vmatprep.subr.mxu0 0.0
    %893 = vmatpush1.msra.mxu0 %v890
    %894 = vmatprep.subr.mxu0 0.0
    %895 = vmatpush1.msra.mxu0 0.0
    %896 = vmatprep.subr.mxu0 0.0
    %897 = vmatpush1.msra.mxu0 0.0
    %898 = vmatprep.subr.mxu0 0.0
    %899 = vmatpush1.msra.mxu0 0.0
    %900 = vmatprep.subr.mxu0 0.0
    %901 = vmatpush1.msra.mxu0 0.0
    %902 = vmatprep.subr.mxu0 0.0
    %903 = vmatpush1.msra.mxu0 0.0
    %904 = vmatprep.subr.mxu0 0.0
    %905 = vmatpush1.msra.mxu0 0.0
    %906 = vmatprep.subr.mxu0 0.0
    %907 = vmatpush1.msra.mxu0 0.0
    %908 = vmatprep.subr.mxu0 0.0
    %909 = vmatpush1.msra.mxu0 0.0
    %910 = vmatprep.subr.mxu0 0.0
    %911 = vmatpush1.msra.mxu0 0.0
    %912 = vmatprep.subr.mxu0 0.0
    %913 = vmatpush1.msra.mxu0 0.0
    %914 = vmatprep.subr.mxu0 0.0
    %915 = vmatpush1.msra.mxu0 0.0
    %916 = vmatprep.subr.mxu0 0.0
    %917 = vmatpush1.msra.mxu0 0.0
    %918 = vmatprep.subr.mxu0 0.0
    %919 = vmatpush1.msra.mxu0 0.0
    %920 = vmatprep.subr.mxu0 0.0
    %921 = vmatpush1.msra.mxu0 0.0
    %922 = vmatprep.subr.mxu0 0.0
    %923 = vmatpush1.msra.mxu0 0.0
    %924 = vmatprep.subr.mxu0 0.0
    %925 = vmatpush1.msra.mxu0 0.0
    %926 = vmatprep.subr.mxu0 0.0
    %927 = vmatpush1.msra.mxu0 0.0
    %928 = vmatprep.subr.mxu0 0.0
    %929 = vmatpush1.msra.mxu0 0.0
    %930 = vmatprep.subr.mxu0 0.0
    %931 = vmatpush1.msra.mxu0 0.0
    %932 = vmatprep.subr.mxu0 0.0
    %933 = vmatpush1.msra.mxu0 0.0
    %934 = vmatprep.subr.mxu0 0.0
    %935 = vmatpush1.msra.mxu0 0.0
    %936 = vmatprep.subr.mxu0 0.0
    %937 = vmatpush1.msra.mxu0 0.0
    %938 = vmatprep.subr.mxu0 0.0
    %939 = vmatpush1.msra.mxu0 0.0
    %940 = vmatprep.subr.mxu0 0.0
    %941 = vmatpush1.msra.mxu0 0.0
    %942 = vmatprep.subr.mxu0 0.0
    %943 = vmatpush1.msra.mxu0 0.0
    %944 = vmatprep.subr.mxu0 0.0
    %945 = vmatpush1.msra.mxu0 0.0
    %946 = vmatprep.subr.mxu0 0.0
    %947 = vmatpush1.msra.mxu0 0.0
    %948 = vmatprep.subr.mxu0 0.0
    %949 = vmatpush1.msra.mxu0 0.0
    %950 = vmatprep.subr.mxu0 0.0
    %951 = vmatpush1.msra.mxu0 0.0
    %952 = vmatprep.subr.mxu0 0.0
    %953 = vmatpush1.msra.mxu0 0.0
    %954 = vmatprep.subr.mxu0 0.0
    %955 = vmatpush1.msra.mxu0 0.0
    %956 = vmatprep.mubr.f32.mxu0 0.0
    %957 = vmatmul.mubr.f32.gmra.mrb[0].mxu0 %v881
    %v958 = vpop.f32.mrb[0].mxu0
    %v959 = vadd.f32 0.0, %v958
    %v960 = vpop.f32.mrb[0].mxu0
    %961 = vmatprep.mubr.f32.mxu0 0.0
    %962 = vmatmul.mubr.f32.gmra.mrb[0].mxu0 %v883
    %v963 = vpop.f32.mrb[0].mxu0
    %v964 = vadd.f32 0.0, %v963
    %v965 = vpop.f32.mrb[0].mxu0
    %966 = vmatprep.mubr.f32.mxu0 0.0
    %967 = vmatmul.mubr.f32.gmra.mrb[0].mxu0 %v885
    %v968 = vpop.f32.mrb[0].mxu0
    %v969 = vadd.f32 0.0, %v968
    %v970 = vpop.f32.mrb[0].mxu0
    %971 = vmatprep.mubr.f32.mxu0 0.0
    %972 = vmatmul.mubr.f32.gmra.mrb[0].mxu0 %v887
    %v973 = vpop.f32.mrb[0].mxu0
    %v974 = vadd.f32 0.0, %v973
    %v975 = vpop.f32.mrb[0].mxu0
    %976 = vdwg.mxu0
    %v977 = vsub.f32 %v668, %v959
    %v978 = vsub.f32 %v672, %v964
    %v979 = vsub.f32 %v678, %v969
    %v980 = vsub.f32 %v682, %v974
    %v981 = vand.u32 2147483647, %v977
    %v982 = vand.u32 2147483647, %v978
    %v983 = vand.u32 2147483647, %v979
    %v984 = vand.u32 2147483647, %v980
    %vm985 = vcmp.lt.f32.partialorder %v981, 0.11111111
    %vm986 = vcmp.lt.f32.partialorder %v982, 0.11111111
    %vm987 = vcmp.lt.f32.partialorder %v983, 0.11111111
    %vm988 = vcmp.lt.f32.partialorder %v984, 0.11111111
    %v989 = vmul.f32 %v977, 0.5
    %v990 = vmul.f32 %v978, 0.5
    %v991 = vmul.f32 %v979, 0.5
    %v992 = vmul.f32 %v980, 0.5
    %v993 = vmul.f32 %v989, %v977
    %v994 = vmul.f32 %v990, %v978
    %v995 = vmul.f32 %v991, %v979
    %v996 = vmul.f32 %v992, %v980
    %v997 = vrcp.pop 0.11111111
    %v998 = vmul.f32 %v993, %v997
    %v999 = vmul.f32 %v994, %v997
    %v1000 = vmul.f32 %v995, %v997
    %v1001 = vmul.f32 %v996, %v997
    %v1002 = vsub.f32 %v981, 0.055555556
    %v1003 = vsub.f32 %v982, 0.055555556
    %v1004 = vsub.f32 %v983, 0.055555556
    %v1005 = vsub.f32 %v984, 0.055555556
    %v1006 = vsel %vm985, %v998, %v1002
    %v1007 = vsel %vm986, %v999, %v1003
    %v1008 = vsel %vm987, %v1000, %v1004
    %v1009 = vsel %vm988, %v1001, %v1005
    %v1010 = vlaneseq
    %v1011 = vshrl.u32 %v1010, 7
    %v1012 = vsub.s32 0, %v1011
    %v1013 = vrot.slane %v195, %v1012
    %vm1014 = vcmp.eq.f32.partialorder %v1013, %v812
    %vm1015 = vcmp.eq.f32.partialorder %v1013, %v817
    %vm1016 = vcmp.eq.f32.partialorder %v1013, %v822
    %vm1017 = vcmp.eq.f32.partialorder %v1013, %v827
    %1018 = vset.pattern.permute.xlu0 0
    %1019 = vperm.xlu0 %1018, %v749
    %v1020 = vpop.permute.xlu0 %1019
    %1021 = vset.pattern.permute.xlu0 0
    %1022 = vperm.xlu0 %1021, %v750
    %v1023 = vpop.permute.xlu0 %1022
    %1024 = vset.pattern.permute.xlu0 0
    %1025 = vperm.xlu0 %1024, %v751
    %v1026 = vpop.permute.xlu0 %1025
    %1027 = vset.pattern.permute.xlu0 0
    %1028 = vperm.xlu0 %1027, %v752
    %v1029 = vpop.permute.xlu0 %1028
    %vm1030 = vcmp.eq.s32.totalorder %v1020, 1
    %vm1031 = vcmp.eq.s32.totalorder %v1023, 1
    %vm1032 = vcmp.eq.s32.totalorder %v1026, 1
    %vm1033 = vcmp.eq.s32.totalorder %v1029, 1
    %vm1034 = vmand %vm1014, %vm1030
    %vm1035 = vmand %vm1015, %vm1031
    %vm1036 = vmand %vm1016, %vm1032
    %vm1037 = vmand %vm1017, %vm1033
    %v1038 = vsel %vm1034, %v1006, 0.0
    %v1039 = vsel %vm1035, %v1007, 0.0
    %v1040 = vsel %vm1036, %v1008, 0.0
    %v1041 = vsel %vm1037, %v1009, 0.0
    %v1042 = vadd.f32 %v1038, %v1039
    %v1043 = vadd.f32 %v1042, %v1040
    %v1044 = vadd.f32 %v1043, %v1041
    %1045 = vadd.xlane.f32.xlu0 %v1044
    %v1046 = vpop.xlane.xlu0 %1045
    %v1047 = vrot.slane %v1046, 4
    %v1048 = vadd.f32 %v1046, %v1047
    %v1049 = vrot.slane %v1048, 2
    %v1050 = vadd.f32 %v1048, %v1049
    %v1051 = vrot.slane %v1050, 1
    %v1052 = vadd.f32 %v1050, %v1051
    %s1053 = vtos %v1052
    %v1054 = vmul.f32 %v197, 1.2732395
    %v1055 = vmul.f32 %v198, 1.2732395
    %v1056 = vmul.f32 %v199, 1.2732395
    %v1057 = vmul.f32 %v200, 1.2732395
    %v1058 = vfloor.f32 %v1054
    %v1059 = vfloor.f32 %v1055
    %v1060 = vfloor.f32 %v1056
    %v1061 = vfloor.f32 %v1057
    %v1062 = vmax.f32 %v1058, 0.0
    %v1063 = vmax.f32 %v1059, 0.0
    %v1064 = vmax.f32 %v1060, 0.0
    %v1065 = vmax.f32 %v1061, 0.0
    %v1066 = vmin.f32 %v1062, 3.0
    %v1067 = vmin.f32 %v1063, 3.0
    %v1068 = vmin.f32 %v1064, 3.0
    %v1069 = vmin.f32 %v1065, 3.0
    %v1070 = vlaneseq
    %v1071 = vshrl.u32 %v1070, 7
    %v1072 = vsub.s32 0, %v1071
    %v1073 = vrot.slane %v196, %v1072
    %v1074 = vadd.f32 %v719, %v1073
    %v1075 = vadd.f32 %v722, %v1073
    %v1076 = vadd.f32 %v727, %v1073
    %v1077 = vadd.f32 %v730, %v1073
    %1078 = vmax.xlane.f32.xlu0 %v1074
    %v1079 = vpop.xlane.xlu0 %1078
    %1080 = vmax.xlane.f32.xlu0 %v1075
    %v1081 = vpop.xlane.xlu0 %1080
    %1082 = vmax.xlane.f32.xlu0 %v1076
    %v1083 = vpop.xlane.xlu0 %1082
    %1084 = vmax.xlane.f32.xlu0 %v1077
    %v1085 = vpop.xlane.xlu0 %1084
    %v1086 = vsub.f32 %v1074, %v1079
    %v1087 = vsub.f32 %v1075, %v1081
    %v1088 = vsub.f32 %v1076, %v1083
    %v1089 = vsub.f32 %v1077, %v1085
    %v1090 = vmul.f32 %v1086, 1.442695
    %v1091 = vpow.pop %v1090
    %v1092 = vmul.f32 %v1087, 1.442695
    %v1093 = vpow.pop %v1092
    %v1094 = vmul.f32 %v1088, 1.442695
    %v1095 = vpow.pop %v1094
    %v1096 = vmul.f32 %v1089, 1.442695
    %v1097 = vpow.pop %v1096
    %1098 = vadd.xlane.f32.xlu0 %v1091
    %v1099 = vpop.xlane.xlu0 %1098
    %1100 = vadd.xlane.f32.xlu0 %v1093
    %v1101 = vpop.xlane.xlu0 %1100
    %1102 = vadd.xlane.f32.xlu0 %v1095
    %v1103 = vpop.xlane.xlu0 %1102
    %1104 = vadd.xlane.f32.xlu0 %v1097
    %v1105 = vpop.xlane.xlu0 %1104
    %v1106 = vlog2.pop %v1099
    %v1107 = vmul.f32 %v1106, 0.6931472
    %v1108 = vlog2.pop %v1101
    %v1109 = vmul.f32 %v1108, 0.6931472
    %v1110 = vlog2.pop %v1103
    %v1111 = vmul.f32 %v1110, 0.6931472
    %v1112 = vlog2.pop %v1105
    %v1113 = vmul.f32 %v1112, 0.6931472
    %v1114 = vadd.f32 %v1079, %v1107
    %v1115 = vadd.f32 %v1081, %v1109
    %v1116 = vadd.f32 %v1083, %v1111
    %v1117 = vadd.f32 %v1085, %v1113
    %v1118 = vlaneseq
    %v1119 = vshrl.u32 %v1118, 7
    %v1120 = vsub.s32 1, %v1119
    %v1121 = vrot.slane %v196, %v1120
    %1123 = vset.pattern.permute.xlu0 5
    %1124 = vperm.xlu0 %1123, %v1066
    %v1125 = vpop.permute.xlu0 %1124
    %1128 = vset.pattern.permute.xlu0 5
    %1129 = vperm.xlu0 %1128, %v1067
    %v1130 = vpop.permute.xlu0 %1129
    %1133 = vset.pattern.permute.xlu0 5
    %1134 = vperm.xlu0 %1133, %v1068
    %v1135 = vpop.permute.xlu0 %1134
    %1138 = vset.pattern.permute.xlu0 5
    %1139 = vperm.xlu0 %1138, %v1069
    %v1140 = vpop.permute.xlu0 %1139
    %vm1142 = vcmp.eq.f32.partialorder %v1121, %v1125
    %vm1143 = vcmp.eq.f32.partialorder %v1121, %v1130
    %vm1144 = vcmp.eq.f32.partialorder %v1121, %v1135
    %vm1145 = vcmp.eq.f32.partialorder %v1121, %v1140
    %v1146 = vsel %vm1142, %v719, 0.0
    %v1147 = vsel %vm1143, %v722, 0.0
    %v1148 = vsel %vm1144, %v727, 0.0
    %v1149 = vsel %vm1145, %v730, 0.0
    %1150 = vadd.xlane.f32.xlu0 %v1146
    %v1151 = vpop.xlane.xlu0 %1150
    %1152 = vadd.xlane.f32.xlu0 %v1147
    %v1153 = vpop.xlane.xlu0 %1152
    %1154 = vadd.xlane.f32.xlu0 %v1148
    %v1155 = vpop.xlane.xlu0 %1154
    %1156 = vadd.xlane.f32.xlu0 %v1149
    %v1157 = vpop.xlane.xlu0 %1156
    %v1158 = vsub.f32 %v1114, %v1151
    %v1159 = vsub.f32 %v1115, %v1153
    %v1160 = vsub.f32 %v1116, %v1155
    %v1161 = vsub.f32 %v1117, %v1157
    %v1162 = vmul.f32 %v753, %v1158
    %v1163 = vmul.f32 %v754, %v1159
    %v1164 = vmul.f32 %v755, %v1160
    %v1165 = vmul.f32 %v756, %v1161
    %v1166 = vsel %vm853, %v1162, 0.0
    %v1167 = vsel %vm853, %v1163, 0.0
    %v1168 = vadd.f32 %v1166, %v1167
    %v1169 = vsel %vm853, %v1164, 0.0
    %v1170 = vadd.f32 %v1168, %v1169
    %v1171 = vsel %vm853, %v1165, 0.0
    %v1172 = vadd.f32 %v1170, %v1171
    %1173 = vadd.xlane.f32.xlu0 %v1172
    %v1174 = vpop.xlane.xlu0 %1173
    %v1175 = vrot.slane %v1174, 4
    %v1176 = vadd.f32 %v1174, %v1175
    %v1177 = vrot.slane %v1176, 2
    %v1178 = vadd.f32 %v1176, %v1177
    %v1179 = vrot.slane %v1178, 1
    %v1180 = vadd.f32 %v1178, %v1179
    %s1181 = vtos %v1180
    %v1182 = vsel %vm853, %v753, 0.0
    %v1183 = vsel %vm853, %v754, 0.0
    %v1184 = vadd.f32 %v1182, %v1183
    %v1185 = vsel %vm853, %v755, 0.0
    %v1186 = vadd.f32 %v1184, %v1185
    %v1187 = vsel %vm853, %v756, 0.0
    %v1188 = vadd.f32 %v1186, %v1187
    %1189 = vadd.xlane.f32.xlu0 %v1188
    %v1190 = vpop.xlane.xlu0 %1189
    %v1191 = vrot.slane %v1190, 4
    %v1192 = vadd.f32 %v1190, %v1191
    %v1193 = vrot.slane %v1192, 2
    %v1194 = vadd.f32 %v1192, %v1193
    %v1195 = vrot.slane %v1194, 1
    %v1196 = vadd.f32 %v1194, %v1195
    %s1197 = vtos %v1196
    %v1198 = vsel %vm853, %v741, 0.0
    %v1199 = vsel %vm853, %v742, 0.0
    %v1200 = vadd.f32 %v1198, %v1199
    %v1201 = vsel %vm853, %v743, 0.0
    %v1202 = vadd.f32 %v1200, %v1201
    %v1203 = vsel %vm853, %v744, 0.0
    %v1204 = vadd.f32 %v1202, %v1203
    %1205 = vadd.xlane.f32.xlu0 %v1204
    %v1206 = vpop.xlane.xlu0 %1205
    %v1207 = vrot.slane %v1206, 4
    %v1208 = vadd.f32 %v1206, %v1207
    %v1209 = vrot.slane %v1208, 2
    %v1210 = vadd.f32 %v1208, %v1209
    %v1211 = vrot.slane %v1210, 1
    %v1212 = vadd.f32 %v1210, %v1211
    %s1213 = vtos %v1212
    %v1214 = vlaneseq
    %v1215 = vand.u32 %v1214, 127
    %v1216 = vlaneseq
    %v1217 = vshrl.u32 %v1216, 7
    %vm1218 = vcmp.eq.s32.totalorder %v1217, 0
    %vm1219 = vcmp.eq.s32.totalorder %v1215, 0
    %vm1220 = vmand %vm1218, %vm1219
    %vm1221 = vcmp.eq.s32.totalorder %v1215, 1
    %vm1222 = vmand %vm1218, %vm1221
    %vm1223 = vcmp.eq.s32.totalorder %v1215, 2
    %vm1224 = vmand %vm1218, %vm1223
    %vm1225 = vcmp.eq.s32.totalorder %v1215, 3
    %vm1226 = vmand %vm1218, %vm1225
    %vm1227 = vcmp.eq.s32.totalorder %v1215, 4
    %vm1228 = vmand %vm1218, %vm1227
    %v1229 = vstv %s1213
    %v1230 = vsel %vm1228, %v1229, 0.0
    %v1231 = vstv %s1197
    %v1232 = vsel %vm1226, %v1231, %v1230
    %v1233 = vstv %s1181
    %v1234 = vsel %vm1224, %v1233, %v1232
    %v1235 = vstv %s1053
    %v1236 = vsel %vm1222, %v1235, %v1234
    %v1237 = vstv %s869
    %v1238 = vsel %vm1220, %v1237, %v1236
    %v1239 = vpack.c.bf16 %v670, %v666
    %v1240 = vpack.c.bf16 %v672, %v668
    %v1241 = vpack.c.bf16 %v722, %v719
    %v1242 = vpack.c.bf16 %v680, %v676
    %v1243 = vpack.c.bf16 %v682, %v678
    %v1244 = vpack.c.bf16 %v730, %v727
    %v1251 = vunpack.c.l.b16 %v1239
    %v1252 = vunpack.c.l.b16 %v1240
    %v1253 = vunpack.c.l.b16 %v1241
    %v1254 = vunpack.c.h.b16 %v1239
    %v1255 = vunpack.c.h.b16 %v1240
    %v1256 = vunpack.c.h.b16 %v1241
    %v1257 = vunpack.c.l.b16 %v1242
    %v1258 = vunpack.c.l.b16 %v1243
    %v1259 = vunpack.c.l.b16 %v1244
    %v1260 = vunpack.c.h.b16 %v1242
    %v1261 = vunpack.c.h.b16 %v1243
    %v1262 = vunpack.c.h.b16 %v1244
    %v1263 = vpack.c.b16 %v1252, %v1251
    %v1264 = vpack.c.b16 %v1253, %v1253
    %v1265 = vpack.c.b16 %v1255, %v1254
    %v1266 = vpack.c.b16 %v1256, %v1256
    %v1267 = vpack.c.b16 %v1258, %v1257
    %v1268 = vpack.c.b16 %v1259, %v1259
    %v1269 = vpack.c.b16 %v1261, %v1260
    %v1270 = vpack.c.b16 %v1262, %v1262
    %1279 = vst [vmem:[#allocation11] sm:$0xff] %v1263
    %1280 = vst [vmem:[#allocation11 + $0x8] sm:$0xf] %v1264
    %1281 = vst [vmem:[#allocation11 + $0xc] sm:$0xff] %v1265
    %1282 = vst [vmem:[#allocation11 + $0x14] sm:$0xf] %v1266
    %1283 = vst [vmem:[#allocation11 + $0x18] sm:$0xff] %v1267
    %1284 = vst [vmem:[#allocation11 + $0x20] sm:$0xf] %v1268
    %1285 = vst [vmem:[#allocation11 + $0x24] sm:$0xff] %v1269
    %1286 = vst [vmem:[#allocation11 + $0x2c] sm:$0xf] %v1270
    %1287 = vst [vmem:[#allocation12] sm:$0xff] %v1238
    // Predicated region
    $region66: #{tpu_custom_call.1} parent=1 // pred_check
      _
    $region67: #{tpu_custom_call.1} parent=1 // pred_check_branch
      %1289 = sbr.rel (0) target = $region69
    $region68: #{tpu_custom_call.1} parent=1 // pred_region
      %s1291 = ssub.s32 768, 768
      %1292 = vsyncadd [#allocation4], %s1291
      %s1293 = sshll.u32 [#allocation11], 4
      %s1294 = int_to_ptr.vmem [resolvable:$true] %s1293
      %1299 = dma.vmem_to_hbm [thread:$0]  %s1294, 768, %s11, [#allocation4], 192, 192, 12
    $region69: #{tpu_custom_call.1} parent=1 // pred_fallthru
      _
    // Predicated region
    $region70: #{tpu_custom_call.1} parent=1 // pred_check
      _
    $region71: #{tpu_custom_call.1} parent=1 // pred_check_branch
      %1301 = sbr.rel (0) target = $region73
    $region72: #{tpu_custom_call.1} parent=1 // pred_region
      %s1303 = ssub.s32 128, 128
      %1304 = vsyncadd [#allocation13], %s1303
      %s1306 = sshll.u32 [#allocation12], 4
      %s1307 = int_to_ptr.vmem [resolvable:$true] %s1306
      %1309 = dma.vmem_to_hbm [thread:$0]  %s1307, 128, %s12, [#allocation13]
    $region73: #{tpu_custom_call.1} parent=1 // pred_fallthru
      _
    // Predicated region
    $region74: #{tpu_custom_call.1} parent=1 // pred_check
      _
    $region75: #{tpu_custom_call.1} parent=1 // pred_check_branch
      %1311 = sbr.rel (0) target = $region77
    $region76: #{tpu_custom_call.1} parent=1 // pred_region
      %1312 = dma.done [#allocation4], 768
    $region77: #{tpu_custom_call.1} parent=1 // pred_fallthru
      _
    // Predicated region
    $region78: #{tpu_custom_call.1} parent=1 // pred_check
      _
    $region79: #{tpu_custom_call.1} parent=1 // pred_check_branch
      %1314 = sbr.rel (0) target = $region81
    $region80: #{tpu_custom_call.1} parent=1 // pred_region
      %1315 = dma.done [#allocation13], 128
    $region81: #{tpu_custom_call.1} parent=1 // pred_fallthru
      _
    %1316 = vsyncpa [#allocation3], 1
    %1317 = vsyncpa [#allocation6], 1
    %1318 = vsyncpa [#allocation9], 1
    %1319 = vsyncpa [#allocation4], 1
    %1320 = vsyncpa [#allocation13], 1

</llo_original>
